<compile_context>
chip_gen: v6e
topology: v6e:2x2x1
jax: 0.10.0
libtpu: 0.0.40
codegen_flags: <defaults>
</compile_context>

<pallas_src>
import functools

import jax
import jax.numpy as jnp
from jax.experimental import pallas as pl
from jax.experimental.pallas import tpu as pltpu


# ----------------------------- in-kernel helpers -----------------------------

def _shift_lane(x, off):
    """y[:, j] = x[:, j + off], zeros where j + off is out of range."""
    if off == 0:
        return x
    c = x.shape[0]
    zeros = jnp.zeros((c, abs(off)), x.dtype)
    if off > 0:
        return jnp.concatenate([x[:, off:], zeros], axis=1)
    return jnp.concatenate([zeros, x[:, :off]], axis=1)


def _conv3x3_flat(xf, w2d, mask, wp_pad, relu):
    """3x3 conv (stride 1, pad 1, no bias) on a padded-flat feature map.

    xf:   (Cin, M) f32, M = N*Hp*Wp padded-flat layout with a zeroed halo.
    w2d:  (Cout, 9*Cin) bf16, column order (dy, dx, cin).
    mask: (1, M) f32, 1 on valid pixels, 0 elsewhere (halo / pad ring).
    Returns (Cout, M) f32, zero outside the valid region.
    """
    xb = xf.astype(jnp.bfloat16)                       # cast once, shift in bf16
    blocks = []
    for dy in range(3):
        for dx in range(3):
            blocks.append(_shift_lane(xb, (dy - 1) * wp_pad + (dx - 1)))
    stack = jnp.concatenate(blocks, axis=0)            # (9*Cin, M) bf16
    out = jnp.dot(w2d, stack, preferred_element_type=jnp.float32)   # (Cout, M)
    if relu:
        out = jnp.maximum(out, 0.0)
    return out * mask                                  # re-zero halo / pad ring


def _double_conv_flat(xf, w1_2d, wp_2d, mask, wp_pad, dc3):
    """Conv3x3 -> ReLU -> PConv2d(n_div=4) -> ReLU, fully in padded-flat layout."""
    h = _conv3x3_flat(xf, w1_2d, mask, wp_pad, relu=True)           # (mid, M)
    h1 = _conv3x3_flat(h[:dc3], wp_2d, mask, wp_pad, relu=True)     # (dc3, M)
    # channels [dc3:] are untouched by PConv and already >= 0 -> final ReLU is
    # a no-op there; the channel split/concat stays in VMEM.
    return jnp.concatenate([h1, h[dc3:]], axis=0)


# --------------------------------- kernel ------------------------------------

def _up_fused_kernel(xk_ref, bkt_ref, x2_ref, w1a_ref, wpa_ref, w1b_ref,
                     wpb_ref, mask1_ref, mask2_ref, o_ref, *, wp_pad, dc3a, dc3b):
    # 1) Fused bilinear 2x upsample + F.pad placement: one matmul against the
    #    block-diagonal Kronecker operator yields the upsampled map embedded at
    #    its padded position in padded-flat layout (zero halo + zero pad ring).
    u = jnp.dot(xk_ref[...], bkt_ref[...],
                preferred_element_type=jnp.float32)                 # (C, M)
    # 2) DoubleConv #1 masked to the (2H, 2W) image region (conv-before-pad).
    h1 = _double_conv_flat(u, w1a_ref[...], wpa_ref[...], mask1_ref[...],
                           wp_pad, dc3a)
    # 3) torch.cat([x2, x1], dim=1) in VMEM + DoubleConv #2 over (Hc, Wc).
    xcat = jnp.concatenate([x2_ref[...], h1], axis=0)               # (C2+C1, M)
    out = _double_conv_flat(xcat, w1b_ref[...], wpb_ref[...], mask2_ref[...],
                            wp_pad, dc3b)
    o_ref[...] = out.astype(o_ref.dtype)


# ------------------------------ wrapper helpers -------------------------------

def _interp_matrix(n_out, n_in):
    """align_corners=True bilinear interpolation matrix of shape (n_out, n_in)."""
    if n_in == 1:
        return jnp.ones((n_out, 1), jnp.float32)
    if n_out == 1:
        return jnp.zeros((1, n_in), jnp.float32).at[0, 0].set(1.0)
    src = jnp.arange(n_out, dtype=jnp.float32) * (n_in - 1) / (n_out - 1)
    i0 = jnp.clip(jnp.floor(src).astype(jnp.int32), 0, n_in - 2)
    frac = src - i0.astype(jnp.float32)
    rows = jnp.arange(n_out)
    a = jnp.zeros((n_out, n_in), jnp.float32)
    a = a.at[rows, i0].add(1.0 - frac)
    a = a.at[rows, i0 + 1].add(frac)
    return a


def _embed_interp(n_tgt, n_out, n_in, off):
    """(n_tgt+2, n_in) operator: rows [1+off, 1+off+n_out) hold the
    align_corners interpolation matrix, all other rows (halo + pad) are zero."""
    a = jnp.zeros((n_tgt + 2, n_in), jnp.float32)
    return a.at[1 + off:1 + off + n_out].set(_interp_matrix(n_out, n_in))


def _region_mask(n, hc, wc, row_off, rows, col_off, cols):
    """(1, N*(hc+2)*(wc+2)) f32 mask: 1 inside the given interior sub-region."""
    hp, wpd = hc + 2, wc + 2
    ri = jnp.arange(hp)
    ci = jnp.arange(wpd)
    mrow = (ri >= 1 + row_off) & (ri < 1 + row_off + rows)
    mcol = (ci >= 1 + col_off) & (ci < 1 + col_off + cols)
    m = (mrow[:, None] & mcol[None, :]).astype(jnp.float32)
    return jnp.tile(m.reshape(-1), (n,)).reshape(1, n * hp * wpd)


def _w_to_2d(w):
    """(Cout, Cin, 3, 3) -> (Cout, 9*Cin) bf16, column order (dy, dx, cin)."""
    cout, cin = w.shape[0], w.shape[1]
    return w.transpose(0, 2, 3, 1).reshape(cout, 9 * cin).astype(jnp.bfloat16)


def _flat_from_nchw(x):
    """(N, C, H, W) -> (C, N*(H+2)*(W+2)) padded-flat with a zero halo."""
    n, c, h, w = x.shape
    xp = jnp.pad(x, ((0, 0), (0, 0), (1, 1), (1, 1)))
    return xp.transpose(1, 0, 2, 3).reshape(c, n * (h + 2) * (w + 2))


def _nchw_from_flat(xf, n, h, w):
    c = xf.shape[0]
    return xf.reshape(c, n, h + 2, w + 2)[:, :, 1:-1, 1:-1].transpose(1, 0, 2, 3)


def _full_spec(shape):
    return pl.BlockSpec(shape, lambda: (0,) * len(shape))


_COMPILER_PARAMS = pltpu.CompilerParams(vmem_limit_bytes=32 * 1024 * 1024)


# ---------------------------- pallas_call wrapper -----------------------------

def up_forward(params, x1, x2):
    """Forward pass of Up(in_channels) for x1:(N,C,H,W), x2:(N,C//2,Hc,Wc)."""
    n, c, h, w = x1.shape
    ho, wo = 2 * h, 2 * w
    _, _, hc, wc = x2.shape
    diff_y, diff_x = hc - ho, wc - wo
    # TODO(synk): negative diff (crop) would need a post-conv crop path.
    assert diff_y >= 0 and diff_x >= 0, (diff_y, diff_x)
    pad_t, pad_l = diff_y // 2, diff_x // 2

    hp, wpd = hc + 2, wc + 2
    lp = hp * wpd
    m = n * lp

    # Upsample + F.pad fused into one block-diagonal Kronecker operator that
    # writes directly into the concat-sized padded-flat layout.
    ah = _embed_interp(hc, ho, h, pad_t)                       # (Hc+2, H)
    aw = _embed_interp(wc, wo, w, pad_l)                       # (Wc+2, W)
    b = jnp.kron(ah, aw)                                       # (Lp, H*W)
    bkt = jnp.kron(jnp.eye(n, dtype=jnp.float32), b.T)         # (N*H*W, N*Lp)

    xk = x1.transpose(1, 0, 2, 3).reshape(c, n * h * w)        # (C, N*H*W)
    x2f = _flat_from_nchw(x2)                                  # (C2, M)

    w1a = _w_to_2d(params["conv1"]["w1"])                      # bf16 (mid, 9*C)
    wpa = _w_to_2d(params["conv1"]["wp"])
    w1b = _w_to_2d(params["conv2"]["w1"])
    wpb = _w_to_2d(params["conv2"]["wp"])
    dc3a = params["conv1"]["wp"].shape[0]
    dc3b = params["conv2"]["wp"].shape[0]
    mid_b = params["conv2"]["w1"].shape[0]

    # mask1: valid region of the upsampled (pre-pad) image; mask2: full interior.
    mask1 = _region_mask(n, hc, wc, pad_t, ho, pad_l, wo)
    mask2 = _region_mask(n, hc, wc, 0, hc, 0, wc)

    kernel = functools.partial(_up_fused_kernel, wp_pad=wpd, dc3a=dc3a, dc3b=dc3b)
    ins = (xk, bkt, x2f, w1a, wpa, w1b, wpb, mask1, mask2)
    outf = pl.pallas_call(
        kernel,
        out_shape=jax.ShapeDtypeStruct((mid_b, m), jnp.float32),
        in_specs=[_full_spec(a.shape) for a in ins],
        out_specs=_full_spec((mid_b, m)),
        compiler_params=_COMPILER_PARAMS,
    )(*ins)
    return _nchw_from_flat(outf, n, hc, wc)


# --------------------------- reference (plain JAX) ----------------------------

def _conv3x3_ref(x, w, relu):
    # Same numerics policy as the kernel: bf16 operands, f32 accumulation.
    y = jax.lax.conv_general_dilated(
        x.astype(jnp.bfloat16), w.astype(jnp.bfloat16),
        window_strides=(1, 1), padding=((1, 1), (1, 1)),
        dimension_numbers=("NCHW", "OIHW", "NCHW"),
        preferred_element_type=jnp.float32)
    return jnp.maximum(y, 0.0) if relu else y


def _double_conv_ref(x, p):
    h = _conv3x3_ref(x, p["w1"], relu=True)
    dc3 = p["wp"].shape[0]
    h1 = _conv3x3_ref(h[:, :dc3], p["wp"], relu=False)
    return jnp.maximum(jnp.concatenate([h1, h[:, dc3:]], axis=1), 0.0)


def _up_ref(params, x1, x2):
    _, _, h, w = x1.shape
    ah = _interp_matrix(2 * h, h)
    aw = _interp_matrix(2 * w, w)
    hi = jax.lax.Precision.HIGHEST
    x1u = jnp.einsum('nchw,pw->nchp', x1, aw, precision=hi)
    x1u = jnp.einsum('nchp,oh->ncop', x1u, ah, precision=hi)
    x1u = _double_conv_ref(x1u, params["conv1"])
    diff_y = x2.shape[2] - x1u.shape[2]
    diff_x = x2.shape[3] - x1u.shape[3]
    x1u = jnp.pad(x1u, ((0, 0), (0, 0),
                        (diff_y // 2, diff_y - diff_y // 2),
                        (diff_x // 2, diff_x - diff_x // 2)))
    x = jnp.concatenate([x2, x1u], axis=1)
    return _double_conv_ref(x, params["conv2"])


# ------------------------------------ main ------------------------------------

def init_params(key, in_channels):
    mid = in_channels // 2
    dc3 = mid // 4
    k1, k2, k3, k4 = jax.random.split(key, 4)
    return {
        "conv1": {
            "w1": 0.1 * jax.random.normal(k1, (mid, in_channels, 3, 3), jnp.float32),
            "wp": 0.1 * jax.random.normal(k2, (dc3, dc3, 3, 3), jnp.float32),
        },
        "conv2": {
            "w1": 0.1 * jax.random.normal(k3, (mid, in_channels, 3, 3), jnp.float32),
            "wp": 0.1 * jax.random.normal(k4, (dc3, dc3, 3, 3), jnp.float32),
        },
    }


if __name__ == "__main__":
    key = jax.random.PRNGKey(0)
    kp, kx1, kx2 = jax.random.split(key, 3)

    in_channels = 8
    n, h, w = 2, 8, 8
    params = init_params(kp, in_channels)

    # x1: decoder feature (N, C, H, W); x2: skip connection (N, C//2, 2H, 2W).
    x1 = jax.random.normal(kx1, (n, in_channels, h, w), jnp.float32)
    x2 = jax.random.normal(kx2, (n, in_channels // 2, 2 * h, 2 * w), jnp.float32)

    out = jax.block_until_ready(jax.jit(up_forward)(params, x1, x2))
    ref = jax.block_until_ready(jax.jit(_up_ref)(params, x1, x2))

    assert out.shape == (n, in_channels // 2, 2 * h, 2 * w), out.shape
    max_err = float(jnp.max(jnp.abs(out - ref)))
    assert jnp.allclose(out, ref, atol=1e-2, rtol=1e-2), max_err
    print("KERNEL_OK")
</pallas_src>

<mosaic_0001>
module attributes {stable_mosaic.version = 11 : i64} {
  func.func private @main(%arg0: i32) attributes {dimension_semantics = [#tpu.dimension_semantics<core_parallel>], iteration_bounds = array<i64: 2>, tpu.core_type = #tpu.core_type<sc_scalar_subcore>, window_params = []} {
    return
  }
}

module attributes {stable_mosaic.version = 11 : i64} {
  func.func private @main(%arg0: i32) attributes {dimension_semantics = [#tpu.dimension_semantics<core_parallel>], iteration_bounds = array<i64: 2>, tpu.core_type = #tpu.core_type<sc_scalar_subcore>, window_params = []} {
    return
  }
}

module attributes {stable_mosaic.version = 11 : i64} {
  func.func @_up_fused_kernel(%arg0: memref<8x128xf32, #tpu.memory_space<vmem>>, %arg1: memref<128x648xf32, #tpu.memory_space<vmem>>, %arg2: memref<4x648xf32, #tpu.memory_space<vmem>>, %arg3: memref<4x72xbf16, #tpu.memory_space<vmem>>, %arg4: memref<1x9xbf16, #tpu.memory_space<vmem>>, %arg5: memref<4x72xbf16, #tpu.memory_space<vmem>>, %arg6: memref<1x9xbf16, #tpu.memory_space<vmem>>, %arg7: memref<1x648xf32, #tpu.memory_space<vmem>>, %arg8: memref<1x648xf32, #tpu.memory_space<vmem>>, %arg9: memref<4x648xf32, #tpu.memory_space<vmem>>) attributes {dimension_semantics = [], scalar_prefetch = 0 : i64, scratch_operands = 0 : i64, tpu.core_type = #tpu.core_type<tc>} {
    %c0 = arith.constant 0 : index
    %c0_0 = arith.constant 0 : index
    %0 = vector.load %arg0[%c0, %c0_0] : memref<8x128xf32, #tpu.memory_space<vmem>>, vector<8x128xf32>
    %c0_1 = arith.constant 0 : index
    %c0_2 = arith.constant 0 : index
    %1 = vector.load %arg1[%c0_1, %c0_2] : memref<128x648xf32, #tpu.memory_space<vmem>>, vector<128x648xf32>
    %cst = arith.constant dense<0.000000e+00> : vector<8x648xf32>
    %2 = tpu.matmul %0, %1, %cst {dimension_numbers = #tpu.dot_dimension_numbers<[1], [0], [0], [1], [0, 0, 1, 1], [], []>} : vector<8x128xf32>, vector<128x648xf32>, vector<8x648xf32> -> vector<8x648xf32>
    %c0_3 = arith.constant 0 : index
    %c0_4 = arith.constant 0 : index
    %3 = vector.load %arg3[%c0_3, %c0_4] : memref<4x72xbf16, #tpu.memory_space<vmem>>, vector<4x72xbf16>
    %c0_5 = arith.constant 0 : index
    %c0_6 = arith.constant 0 : index
    %4 = vector.load %arg4[%c0_5, %c0_6] : memref<1x9xbf16, #tpu.memory_space<vmem>>, vector<1x9xbf16>
    %c0_7 = arith.constant 0 : index
    %c0_8 = arith.constant 0 : index
    %5 = vector.load %arg7[%c0_7, %c0_8] : memref<1x648xf32, #tpu.memory_space<vmem>>, vector<1x648xf32>
    %6 = arith.truncf %2 : vector<8x648xf32> to vector<8x648xbf16>
    %cst_9 = arith.constant 0.000000e+00 : bf16
    %7 = vector.broadcast %cst_9 : bf16 to vector<8x19xbf16>
    %8 = vector.extract_strided_slice %6 {offsets = [0, 0], sizes = [8, 629], strides = [1, 1]} : vector<8x648xbf16> to vector<8x629xbf16>
    %9 = tpu.concatenate %7, %8 in 1 : vector<8x19xbf16>, vector<8x629xbf16> -> vector<8x648xbf16>
    %cst_10 = arith.constant 0.000000e+00 : bf16
    %10 = vector.broadcast %cst_10 : bf16 to vector<8x18xbf16>
    %11 = vector.extract_strided_slice %6 {offsets = [0, 0], sizes = [8, 630], strides = [1, 1]} : vector<8x648xbf16> to vector<8x630xbf16>
    %12 = tpu.concatenate %10, %11 in 1 : vector<8x18xbf16>, vector<8x630xbf16> -> vector<8x648xbf16>
    %cst_11 = arith.constant 0.000000e+00 : bf16
    %13 = vector.broadcast %cst_11 : bf16 to vector<8x17xbf16>
    %14 = vector.extract_strided_slice %6 {offsets = [0, 0], sizes = [8, 631], strides = [1, 1]} : vector<8x648xbf16> to vector<8x631xbf16>
    %15 = tpu.concatenate %13, %14 in 1 : vector<8x17xbf16>, vector<8x631xbf16> -> vector<8x648xbf16>
    %cst_12 = arith.constant 0.000000e+00 : bf16
    %16 = vector.broadcast %cst_12 : bf16 to vector<8x1xbf16>
    %17 = vector.extract_strided_slice %6 {offsets = [0, 0], sizes = [8, 647], strides = [1, 1]} : vector<8x648xbf16> to vector<8x647xbf16>
    %18 = tpu.concatenate %16, %17 in 1 : vector<8x1xbf16>, vector<8x647xbf16> -> vector<8x648xbf16>
    %cst_13 = arith.constant 0.000000e+00 : bf16
    %19 = vector.broadcast %cst_13 : bf16 to vector<8x1xbf16>
    %20 = vector.extract_strided_slice %6 {offsets = [0, 1], sizes = [8, 647], strides = [1, 1]} : vector<8x648xbf16> to vector<8x647xbf16>
    %21 = tpu.concatenate %20, %19 in 1 : vector<8x647xbf16>, vector<8x1xbf16> -> vector<8x648xbf16>
    %cst_14 = arith.constant 0.000000e+00 : bf16
    %22 = vector.broadcast %cst_14 : bf16 to vector<8x17xbf16>
    %23 = vector.extract_strided_slice %6 {offsets = [0, 17], sizes = [8, 631], strides = [1, 1]} : vector<8x648xbf16> to vector<8x631xbf16>
    %24 = tpu.concatenate %23, %22 in 1 : vector<8x631xbf16>, vector<8x17xbf16> -> vector<8x648xbf16>
    %cst_15 = arith.constant 0.000000e+00 : bf16
    %25 = vector.broadcast %cst_15 : bf16 to vector<8x18xbf16>
    %26 = vector.extract_strided_slice %6 {offsets = [0, 18], sizes = [8, 630], strides = [1, 1]} : vector<8x648xbf16> to vector<8x630xbf16>
    %27 = tpu.concatenate %26, %25 in 1 : vector<8x630xbf16>, vector<8x18xbf16> -> vector<8x648xbf16>
    %cst_16 = arith.constant 0.000000e+00 : bf16
    %28 = vector.broadcast %cst_16 : bf16 to vector<8x19xbf16>
    %29 = vector.extract_strided_slice %6 {offsets = [0, 19], sizes = [8, 629], strides = [1, 1]} : vector<8x648xbf16> to vector<8x629xbf16>
    %30 = tpu.concatenate %29, %28 in 1 : vector<8x629xbf16>, vector<8x19xbf16> -> vector<8x648xbf16>
    %31 = tpu.concatenate %9, %12, %15, %18, %6, %21, %24, %27, %30 in 0 : vector<8x648xbf16>, vector<8x648xbf16>, vector<8x648xbf16>, vector<8x648xbf16>, vector<8x648xbf16>, vector<8x648xbf16>, vector<8x648xbf16>, vector<8x648xbf16>, vector<8x648xbf16> -> vector<72x648xbf16>
    %cst_17 = arith.constant dense<0.000000e+00> : vector<4x648xf32>
    %32 = tpu.matmul %3, %31, %cst_17 {dimension_numbers = #tpu.dot_dimension_numbers<[1], [0], [0], [1], [0, 0, 1, 1], [], []>} : vector<4x72xbf16>, vector<72x648xbf16>, vector<4x648xf32> -> vector<4x648xf32>
    %cst_18 = arith.constant 0.000000e+00 : f32
    %33 = vector.broadcast %cst_18 : f32 to vector<4x648xf32>
    %34 = arith.maximumf %32, %33 : vector<4x648xf32>
    %35 = vector.broadcast %5 : vector<1x648xf32> to vector<4x648xf32>
    %36 = arith.mulf %34, %35 : vector<4x648xf32>
    %37 = vector.extract_strided_slice %36 {offsets = [0, 0], sizes = [1, 648], strides = [1, 1]} : vector<4x648xf32> to vector<1x648xf32>
    %38 = arith.truncf %37 : vector<1x648xf32> to vector<1x648xbf16>
    %cst_19 = arith.constant 0.000000e+00 : bf16
    %39 = vector.broadcast %cst_19 : bf16 to vector<1x19xbf16>
    %40 = vector.extract_strided_slice %38 {offsets = [0, 0], sizes = [1, 629], strides = [1, 1]} : vector<1x648xbf16> to vector<1x629xbf16>
    %41 = tpu.concatenate %39, %40 in 1 : vector<1x19xbf16>, vector<1x629xbf16> -> vector<1x648xbf16>
    %cst_20 = arith.constant 0.000000e+00 : bf16
    %42 = vector.broadcast %cst_20 : bf16 to vector<1x18xbf16>
    %43 = vector.extract_strided_slice %38 {offsets = [0, 0], sizes = [1, 630], strides = [1, 1]} : vector<1x648xbf16> to vector<1x630xbf16>
    %44 = tpu.concatenate %42, %43 in 1 : vector<1x18xbf16>, vector<1x630xbf16> -> vector<1x648xbf16>
    %cst_21 = arith.constant 0.000000e+00 : bf16
    %45 = vector.broadcast %cst_21 : bf16 to vector<1x17xbf16>
    %46 = vector.extract_strided_slice %38 {offsets = [0, 0], sizes = [1, 631], strides = [1, 1]} : vector<1x648xbf16> to vector<1x631xbf16>
    %47 = tpu.concatenate %45, %46 in 1 : vector<1x17xbf16>, vector<1x631xbf16> -> vector<1x648xbf16>
    %cst_22 = arith.constant 0.000000e+00 : bf16
    %48 = vector.broadcast %cst_22 : bf16 to vector<1x1xbf16>
    %49 = vector.extract_strided_slice %38 {offsets = [0, 0], sizes = [1, 647], strides = [1, 1]} : vector<1x648xbf16> to vector<1x647xbf16>
    %50 = tpu.concatenate %48, %49 in 1 : vector<1x1xbf16>, vector<1x647xbf16> -> vector<1x648xbf16>
    %cst_23 = arith.constant 0.000000e+00 : bf16
    %51 = vector.broadcast %cst_23 : bf16 to vector<1x1xbf16>
    %52 = vector.extract_strided_slice %38 {offsets = [0, 1], sizes = [1, 647], strides = [1, 1]} : vector<1x648xbf16> to vector<1x647xbf16>
    %53 = tpu.concatenate %52, %51 in 1 : vector<1x647xbf16>, vector<1x1xbf16> -> vector<1x648xbf16>
    %cst_24 = arith.constant 0.000000e+00 : bf16
    %54 = vector.broadcast %cst_24 : bf16 to vector<1x17xbf16>
    %55 = vector.extract_strided_slice %38 {offsets = [0, 17], sizes = [1, 631], strides = [1, 1]} : vector<1x648xbf16> to vector<1x631xbf16>
    %56 = tpu.concatenate %55, %54 in 1 : vector<1x631xbf16>, vector<1x17xbf16> -> vector<1x648xbf16>
    %cst_25 = arith.constant 0.000000e+00 : bf16
    %57 = vector.broadcast %cst_25 : bf16 to vector<1x18xbf16>
    %58 = vector.extract_strided_slice %38 {offsets = [0, 18], sizes = [1, 630], strides = [1, 1]} : vector<1x648xbf16> to vector<1x630xbf16>
    %59 = tpu.concatenate %58, %57 in 1 : vector<1x630xbf16>, vector<1x18xbf16> -> vector<1x648xbf16>
    %cst_26 = arith.constant 0.000000e+00 : bf16
    %60 = vector.broadcast %cst_26 : bf16 to vector<1x19xbf16>
    %61 = vector.extract_strided_slice %38 {offsets = [0, 19], sizes = [1, 629], strides = [1, 1]} : vector<1x648xbf16> to vector<1x629xbf16>
    %62 = tpu.concatenate %61, %60 in 1 : vector<1x629xbf16>, vector<1x19xbf16> -> vector<1x648xbf16>
    %63 = tpu.concatenate %41, %44, %47, %50, %38, %53, %56, %59, %62 in 0 : vector<1x648xbf16>, vector<1x648xbf16>, vector<1x648xbf16>, vector<1x648xbf16>, vector<1x648xbf16>, vector<1x648xbf16>, vector<1x648xbf16>, vector<1x648xbf16>, vector<1x648xbf16> -> vector<9x648xbf16>
    %cst_27 = arith.constant dense<0.000000e+00> : vector<1x648xf32>
    %64 = tpu.matmul %4, %63, %cst_27 {dimension_numbers = #tpu.dot_dimension_numbers<[1], [0], [0], [1], [0, 0, 1, 1], [], []>} : vector<1x9xbf16>, vector<9x648xbf16>, vector<1x648xf32> -> vector<1x648xf32>
    %cst_28 = arith.constant 0.000000e+00 : f32
    %65 = vector.broadcast %cst_28 : f32 to vector<1x648xf32>
    %66 = arith.maximumf %64, %65 : vector<1x648xf32>
    %67 = arith.mulf %66, %5 : vector<1x648xf32>
    %68 = vector.extract_strided_slice %36 {offsets = [1, 0], sizes = [3, 648], strides = [1, 1]} : vector<4x648xf32> to vector<3x648xf32>
    %69 = tpu.concatenate %67, %68 in 0 : vector<1x648xf32>, vector<3x648xf32> -> vector<4x648xf32>
    %c0_29 = arith.constant 0 : index
    %c0_30 = arith.constant 0 : index
    %70 = vector.load %arg2[%c0_29, %c0_30] : memref<4x648xf32, #tpu.memory_space<vmem>>, vector<4x648xf32>
    %71 = tpu.concatenate %70, %69 in 0 : vector<4x648xf32>, vector<4x648xf32> -> vector<8x648xf32>
    %c0_31 = arith.constant 0 : index
    %c0_32 = arith.constant 0 : index
    %72 = vector.load %arg5[%c0_31, %c0_32] : memref<4x72xbf16, #tpu.memory_space<vmem>>, vector<4x72xbf16>
    %c0_33 = arith.constant 0 : index
    %c0_34 = arith.constant 0 : index
    %73 = vector.load %arg6[%c0_33, %c0_34] : memref<1x9xbf16, #tpu.memory_space<vmem>>, vector<1x9xbf16>
    %c0_35 = arith.constant 0 : index
    %c0_36 = arith.constant 0 : index
    %74 = vector.load %arg8[%c0_35, %c0_36] : memref<1x648xf32, #tpu.memory_space<vmem>>, vector<1x648xf32>
    %75 = arith.truncf %71 : vector<8x648xf32> to vector<8x648xbf16>
    %cst_37 = arith.constant 0.000000e+00 : bf16
    %76 = vector.broadcast %cst_37 : bf16 to vector<8x19xbf16>
    %77 = vector.extract_strided_slice %75 {offsets = [0, 0], sizes = [8, 629], strides = [1, 1]} : vector<8x648xbf16> to vector<8x629xbf16>
    %78 = tpu.concatenate %76, %77 in 1 : vector<8x19xbf16>, vector<8x629xbf16> -> vector<8x648xbf16>
    %cst_38 = arith.constant 0.000000e+00 : bf16
    %79 = vector.broadcast %cst_38 : bf16 to vector<8x18xbf16>
    %80 = vector.extract_strided_slice %75 {offsets = [0, 0], sizes = [8, 630], strides = [1, 1]} : vector<8x648xbf16> to vector<8x630xbf16>
    %81 = tpu.concatenate %79, %80 in 1 : vector<8x18xbf16>, vector<8x630xbf16> -> vector<8x648xbf16>
    %cst_39 = arith.constant 0.000000e+00 : bf16
    %82 = vector.broadcast %cst_39 : bf16 to vector<8x17xbf16>
    %83 = vector.extract_strided_slice %75 {offsets = [0, 0], sizes = [8, 631], strides = [1, 1]} : vector<8x648xbf16> to vector<8x631xbf16>
    %84 = tpu.concatenate %82, %83 in 1 : vector<8x17xbf16>, vector<8x631xbf16> -> vector<8x648xbf16>
    %cst_40 = arith.constant 0.000000e+00 : bf16
    %85 = vector.broadcast %cst_40 : bf16 to vector<8x1xbf16>
    %86 = vector.extract_strided_slice %75 {offsets = [0, 0], sizes = [8, 647], strides = [1, 1]} : vector<8x648xbf16> to vector<8x647xbf16>
    %87 = tpu.concatenate %85, %86 in 1 : vector<8x1xbf16>, vector<8x647xbf16> -> vector<8x648xbf16>
    %cst_41 = arith.constant 0.000000e+00 : bf16
    %88 = vector.broadcast %cst_41 : bf16 to vector<8x1xbf16>
    %89 = vector.extract_strided_slice %75 {offsets = [0, 1], sizes = [8, 647], strides = [1, 1]} : vector<8x648xbf16> to vector<8x647xbf16>
    %90 = tpu.concatenate %89, %88 in 1 : vector<8x647xbf16>, vector<8x1xbf16> -> vector<8x648xbf16>
    %cst_42 = arith.constant 0.000000e+00 : bf16
    %91 = vector.broadcast %cst_42 : bf16 to vector<8x17xbf16>
    %92 = vector.extract_strided_slice %75 {offsets = [0, 17], sizes = [8, 631], strides = [1, 1]} : vector<8x648xbf16> to vector<8x631xbf16>
    %93 = tpu.concatenate %92, %91 in 1 : vector<8x631xbf16>, vector<8x17xbf16> -> vector<8x648xbf16>
    %cst_43 = arith.constant 0.000000e+00 : bf16
    %94 = vector.broadcast %cst_43 : bf16 to vector<8x18xbf16>
    %95 = vector.extract_strided_slice %75 {offsets = [0, 18], sizes = [8, 630], strides = [1, 1]} : vector<8x648xbf16> to vector<8x630xbf16>
    %96 = tpu.concatenate %95, %94 in 1 : vector<8x630xbf16>, vector<8x18xbf16> -> vector<8x648xbf16>
    %cst_44 = arith.constant 0.000000e+00 : bf16
    %97 = vector.broadcast %cst_44 : bf16 to vector<8x19xbf16>
    %98 = vector.extract_strided_slice %75 {offsets = [0, 19], sizes = [8, 629], strides = [1, 1]} : vector<8x648xbf16> to vector<8x629xbf16>
    %99 = tpu.concatenate %98, %97 in 1 : vector<8x629xbf16>, vector<8x19xbf16> -> vector<8x648xbf16>
    %100 = tpu.concatenate %78, %81, %84, %87, %75, %90, %93, %96, %99 in 0 : vector<8x648xbf16>, vector<8x648xbf16>, vector<8x648xbf16>, vector<8x648xbf16>, vector<8x648xbf16>, vector<8x648xbf16>, vector<8x648xbf16>, vector<8x648xbf16>, vector<8x648xbf16> -> vector<72x648xbf16>
    %cst_45 = arith.constant dense<0.000000e+00> : vector<4x648xf32>
    %101 = tpu.matmul %72, %100, %cst_45 {dimension_numbers = #tpu.dot_dimension_numbers<[1], [0], [0], [1], [0, 0, 1, 1], [], []>} : vector<4x72xbf16>, vector<72x648xbf16>, vector<4x648xf32> -> vector<4x648xf32>
    %cst_46 = arith.constant 0.000000e+00 : f32
    %102 = vector.broadcast %cst_46 : f32 to vector<4x648xf32>
    %103 = arith.maximumf %101, %102 : vector<4x648xf32>
    %104 = vector.broadcast %74 : vector<1x648xf32> to vector<4x648xf32>
    %105 = arith.mulf %103, %104 : vector<4x648xf32>
    %106 = vector.extract_strided_slice %105 {offsets = [0, 0], sizes = [1, 648], strides = [1, 1]} : vector<4x648xf32> to vector<1x648xf32>
    %107 = arith.truncf %106 : vector<1x648xf32> to vector<1x648xbf16>
    %cst_47 = arith.constant 0.000000e+00 : bf16
    %108 = vector.broadcast %cst_47 : bf16 to vector<1x19xbf16>
    %109 = vector.extract_strided_slice %107 {offsets = [0, 0], sizes = [1, 629], strides = [1, 1]} : vector<1x648xbf16> to vector<1x629xbf16>
    %110 = tpu.concatenate %108, %109 in 1 : vector<1x19xbf16>, vector<1x629xbf16> -> vector<1x648xbf16>
    %cst_48 = arith.constant 0.000000e+00 : bf16
    %111 = vector.broadcast %cst_48 : bf16 to vector<1x18xbf16>
    %112 = vector.extract_strided_slice %107 {offsets = [0, 0], sizes = [1, 630], strides = [1, 1]} : vector<1x648xbf16> to vector<1x630xbf16>
    %113 = tpu.concatenate %111, %112 in 1 : vector<1x18xbf16>, vector<1x630xbf16> -> vector<1x648xbf16>
    %cst_49 = arith.constant 0.000000e+00 : bf16
    %114 = vector.broadcast %cst_49 : bf16 to vector<1x17xbf16>
    %115 = vector.extract_strided_slice %107 {offsets = [0, 0], sizes = [1, 631], strides = [1, 1]} : vector<1x648xbf16> to vector<1x631xbf16>
    %116 = tpu.concatenate %114, %115 in 1 : vector<1x17xbf16>, vector<1x631xbf16> -> vector<1x648xbf16>
    %cst_50 = arith.constant 0.000000e+00 : bf16
    %117 = vector.broadcast %cst_50 : bf16 to vector<1x1xbf16>
    %118 = vector.extract_strided_slice %107 {offsets = [0, 0], sizes = [1, 647], strides = [1, 1]} : vector<1x648xbf16> to vector<1x647xbf16>
    %119 = tpu.concatenate %117, %118 in 1 : vector<1x1xbf16>, vector<1x647xbf16> -> vector<1x648xbf16>
    %cst_51 = arith.constant 0.000000e+00 : bf16
    %120 = vector.broadcast %cst_51 : bf16 to vector<1x1xbf16>
    %121 = vector.extract_strided_slice %107 {offsets = [0, 1], sizes = [1, 647], strides = [1, 1]} : vector<1x648xbf16> to vector<1x647xbf16>
    %122 = tpu.concatenate %121, %120 in 1 : vector<1x647xbf16>, vector<1x1xbf16> -> vector<1x648xbf16>
    %cst_52 = arith.constant 0.000000e+00 : bf16
    %123 = vector.broadcast %cst_52 : bf16 to vector<1x17xbf16>
    %124 = vector.extract_strided_slice %107 {offsets = [0, 17], sizes = [1, 631], strides = [1, 1]} : vector<1x648xbf16> to vector<1x631xbf16>
    %125 = tpu.concatenate %124, %123 in 1 : vector<1x631xbf16>, vector<1x17xbf16> -> vector<1x648xbf16>
    %cst_53 = arith.constant 0.000000e+00 : bf16
    %126 = vector.broadcast %cst_53 : bf16 to vector<1x18xbf16>
    %127 = vector.extract_strided_slice %107 {offsets = [0, 18], sizes = [1, 630], strides = [1, 1]} : vector<1x648xbf16> to vector<1x630xbf16>
    %128 = tpu.concatenate %127, %126 in 1 : vector<1x630xbf16>, vector<1x18xbf16> -> vector<1x648xbf16>
    %cst_54 = arith.constant 0.000000e+00 : bf16
    %129 = vector.broadcast %cst_54 : bf16 to vector<1x19xbf16>
    %130 = vector.extract_strided_slice %107 {offsets = [0, 19], sizes = [1, 629], strides = [1, 1]} : vector<1x648xbf16> to vector<1x629xbf16>
    %131 = tpu.concatenate %130, %129 in 1 : vector<1x629xbf16>, vector<1x19xbf16> -> vector<1x648xbf16>
    %132 = tpu.concatenate %110, %113, %116, %119, %107, %122, %125, %128, %131 in 0 : vector<1x648xbf16>, vector<1x648xbf16>, vector<1x648xbf16>, vector<1x648xbf16>, vector<1x648xbf16>, vector<1x648xbf16>, vector<1x648xbf16>, vector<1x648xbf16>, vector<1x648xbf16> -> vector<9x648xbf16>
    %cst_55 = arith.constant dense<0.000000e+00> : vector<1x648xf32>
    %133 = tpu.matmul %73, %132, %cst_55 {dimension_numbers = #tpu.dot_dimension_numbers<[1], [0], [0], [1], [0, 0, 1, 1], [], []>} : vector<1x9xbf16>, vector<9x648xbf16>, vector<1x648xf32> -> vector<1x648xf32>
    %cst_56 = arith.constant 0.000000e+00 : f32
    %134 = vector.broadcast %cst_56 : f32 to vector<1x648xf32>
    %135 = arith.maximumf %133, %134 : vector<1x648xf32>
    %136 = arith.mulf %135, %74 : vector<1x648xf32>
    %137 = vector.extract_strided_slice %105 {offsets = [1, 0], sizes = [3, 648], strides = [1, 1]} : vector<4x648xf32> to vector<3x648xf32>
    %138 = tpu.concatenate %136, %137 in 0 : vector<1x648xf32>, vector<3x648xf32> -> vector<4x648xf32>
    %c0_57 = arith.constant 0 : index
    %c0_58 = arith.constant 0 : index
    %139 = vector.load %arg9[%c0_57, %c0_58] : memref<4x648xf32, #tpu.memory_space<vmem>>, vector<4x648xf32>
    tpu.vector_store %arg9[%c0_57, %c0_58], %138 {strides = array<i32>} : memref<4x648xf32, #tpu.memory_space<vmem>>, vector<4x648xf32>,
    return
  }
}

</mosaic_0001>

<llo_original>
// kernel: tile.10
$region0: #{tile.10}
  #allocation0 [shape = 's32[1]{0}', space=sflag, size = 0x4, scoped, tag = 'scoped memory for tile.10']
  %s0 = inlined_call_operand.vmem [shape: f32[324], index: 0, kind: input, shape index: {}]
  %s1 = inlined_call_operand.vmem [shape: f32[2,324], index: 1, kind: output, shape index: {}]
  // Predicated region
  $region2: #{tile.10} parent=0 // pred_check
    _
  $region3: #{tile.10} parent=0 // pred_check_branch
    %3 = sbr.rel (0) target = $region5
  $region4: #{tile.10} parent=0 // pred_region
    _
  $region5: #{tile.10} parent=0 // pred_fallthru
    _
  %v4 = vld [vmem:[%s0] ss:$0 sm:$0xff]
  %5 = vst [vmem:[%s1] sm:$0x3] %v4
  %s6 = scalar_lea.vmem %s0, 1
  %v7 = vld [vmem:[%s6] ss:$0 sm:$0xff]
  %s8 = scalar_lea.vmem %s1, 2
  %9 = vst [vmem:[%s8] sm:$0x3] %v7
  %s10 = scalar_lea.vmem %s0, 2
  %v11 = vld [vmem:[%s10] ss:$0 sm:$0xff]
  %s12 = scalar_lea.vmem %s1, 4
  %13 = vst [vmem:[%s12] sm:$0x3] %v11

// kernel: tile.11
$region0: #{tile.11}
  %s0 = inlined_call_operand.vmem [shape: f32[2,324], index: 0, kind: input, shape index: {}]
  %s1 = inlined_call_operand.vmem [shape: f32[1,648], index: 1, kind: output, shape index: {}]
  $region1: #{tile.11} parent=0
    #allocation0 [shape = 'u8[24576]{0}', space=vmem, size = 0x6000, scoped, tag = 'scoped mem for output reshape']
    #allocation1 [shape = 'u8[12288]{0}', space=vmem, size = 0x3000, scoped, tag = 'scoped mem for input reshape']
    %s3 = sshll.u32 1, 2
    %s4 = ssub.s32 %s3, 1
    %s5 = smul.addr 2, 2
    %s6 = scalar_lea.vmem %s0, %s5
    %v7 = vld [vmem:[%s6] sm:%s4]
    %s8 = scalar_lea.vmem [#allocation1], 16
    %9 = vst [vmem:[%s8] sm:%s4] %v7
    %s10 = scalar_lea.vmem %s0, 2
    %v11 = vld [vmem:[%s10] sm:%s4]
    %s12 = scalar_lea.vmem [#allocation1], 8
    %13 = vst [vmem:[%s12] sm:%s4] %v11
    %v14 = vld [vmem:[%s0] sm:%s4]
    %15 = vst [vmem:[#allocation1] sm:%s4] %v14
    %s16 = scalar_lea.vmem [#allocation1], 16
    %v17 = vld [vmem:[%s16] sm:$0x1]
    %vm18 = vcmask 556032
    %s19 = scalar_lea.vmem [#allocation0], 16
    %20 = vst.msk [vmem:[%s19] sm:$0x1] %vm18, %v17
    %s21 = smov 3
    %v22 = vld [vmem:[#allocation1] ss:$8 sm:%s21]
    %23 = vst [vmem:[#allocation0] ss:$8 sm:$0x3] %v22
    %s24 = scalar_lea.vmem [#allocation1], 17
    %v25 = vld [vmem:[%s24] sm:$0x1]
    %s26 = scalar_lea.vmem [#allocation1], 17
    %s27 = smov 3
    %v28 = vld [vmem:[%s26] ss:$-16 sm:%s27]
    %s29 = scalar_lea.vmem [#allocation1], 7
    %v30 = vld [vmem:[%s29] sm:$0x4]
    %vm31 = vcmask 1042434
    %v32 = vsel %vm31, %v30, %v28
    %vm33 = vcmask 490496
    %v34 = vsel %vm33, %v32, %v25
    %35 = vrot.lane.b32.xlu0 %v34, 68
    %v36 = vpop.permute.xlu0 %35
    %vm37 = vcmask 64512
    %s38 = scalar_lea.vmem [#allocation0], 40
    %39 = vst.msk [vmem:[%s38] sm:$0x1] %vm37, %v36
    %vm40 = vcmask 1048096
    %s41 = scalar_lea.vmem [#allocation0], 32
    %42 = vst.msk [vmem:[%s41] ss:$-16 sm:$0x3] %vm40, %v36
    %s43 = scalar_lea.vmem [#allocation0], 22
    %44 = vst.msk [vmem:[%s43] sm:$0x4] %vm40, %v36
    %s45 = scalar_lea.vmem [#allocation1], 9
    %s46 = smov 3
    %v47 = vld [vmem:[%s45] ss:$-8 sm:%s46]
    %48 = vrot.lane.b32.xlu0 %v47, 68
    %v49 = vpop.permute.xlu0 %48
    %vm50 = vcmask 556032
    %s51 = scalar_lea.vmem [#allocation0], 32
    %52 = vst.msk [vmem:[%s51] ss:$-8 sm:$0x3] %vm50, %v49
    %s54 = sshll.u32 1, 1
    %s55 = ssub.s32 %s54, 1
    %v57 = vld [vmem:[#allocation0] sm:%s55]
    %s58 = sshll.u32 1, 1
    %s59 = ssub.s32 %s58, 1
    %60 = vst [vmem:[%s1] sm:%s59] %v57
    %s61 = scalar_lea.vmem [#allocation0], 8
    %v62 = vld [vmem:[%s61] sm:%s55]
    %s63 = sshll.u32 1, 1
    %s64 = ssub.s32 %s63, 1
    %s65 = scalar_lea.vmem %s1, 1
    %66 = vst [vmem:[%s65] sm:%s64] %v62
    %s67 = scalar_lea.vmem [#allocation0], 16
    %v68 = vld [vmem:[%s67] sm:%s55]
    %s69 = sshll.u32 1, 1
    %s70 = ssub.s32 %s69, 1
    %s71 = smul.addr 1, 2
    %s72 = scalar_lea.vmem %s1, %s71
    %73 = vst [vmem:[%s72] sm:%s70] %v68
    %s74 = scalar_lea.vmem [#allocation0], 24
    %v75 = vld [vmem:[%s74] sm:%s55]
    %s76 = sshll.u32 1, 1
    %s77 = ssub.s32 %s76, 1
    %s78 = smul.addr 1, 3
    %s79 = scalar_lea.vmem %s1, %s78
    %80 = vst [vmem:[%s79] sm:%s77] %v75
    %s81 = scalar_lea.vmem [#allocation0], 32
    %v82 = vld [vmem:[%s81] sm:%s55]
    %s83 = sshll.u32 1, 1
    %s84 = ssub.s32 %s83, 1
    %s85 = smul.addr 1, 4
    %s86 = scalar_lea.vmem %s1, %s85
    %87 = vst [vmem:[%s86] sm:%s84] %v82
    %s88 = scalar_lea.vmem [#allocation0], 40
    %v89 = vld [vmem:[%s88] sm:%s55]
    %s90 = sshll.u32 1, 1
    %s91 = ssub.s32 %s90, 1
    %s92 = smul.addr 1, 5
    %s93 = scalar_lea.vmem %s1, %s92
    %94 = vst [vmem:[%s93] sm:%s91] %v89

// kernel: up_forward.1
$region0: #{up_forward.1}
  #allocation0 [shape = 'u32[]', space=smem, size = 0x4, offset = 0x4, fixed_abs, tag = 'smem constant byte address 0x4 - core index']
  #allocation1 [shape = 'u32[144,128]{1,0:T(1,128)}', space=vmem, size = 0x12000, scoped, tag = 'internal scratch']
  %s0 = inlined_call_operand.vmem [shape: f32[8,128], index: 0, kind: input, shape index: {}]
  %s1 = inlined_call_operand.vmem [shape: f32[128,648], index: 1, kind: input, shape index: {}]
  %s2 = inlined_call_operand.vmem [shape: f32[4,648], index: 2, kind: input, shape index: {}]
  %s3 = inlined_call_operand.vmem [shape: bf16[4,72], index: 3, kind: input, shape index: {}]
  %s4 = inlined_call_operand.vmem [shape: bf16[1,9], index: 4, kind: input, shape index: {}]
  %s5 = inlined_call_operand.vmem [shape: bf16[4,72], index: 5, kind: input, shape index: {}]
  %s6 = inlined_call_operand.vmem [shape: bf16[1,9], index: 6, kind: input, shape index: {}]
  %s7 = inlined_call_operand.vmem [shape: f32[1,648], index: 7, kind: input, shape index: {}, may-alias: {7,8}]
  %s8 = inlined_call_operand.vmem [shape: f32[1,648], index: 8, kind: input, shape index: {}, may-alias: {7,8}]
  %s9 = inlined_call_operand.vmem [shape: f32[4,648], index: 9, kind: output, shape index: {}]
  %s10 = sld [smem:[#allocation0]]
  $region46: #{up_forward.1} parent=0
    _
  %s12 = ssub.s32 1, %s10
  %s13 = scalar_select 0, %s12, %s10
  // Predicated region
  $region2: #{up_forward.1} parent=0 // pred_check
    _
  $region3: #{up_forward.1} parent=0 // pred_check_branch
    %15 = sbr.rel (0) target = $region5
  $region4: #{up_forward.1} parent=0 // pred_region
    _
  $region5: #{up_forward.1} parent=0 // pred_fallthru
    _
  // Predicated region
  $region6: #{up_forward.1} parent=0 // pred_check
    _
  $region7: #{up_forward.1} parent=0 // pred_check_branch
    %17 = sbr.rel (0) target = $region9
  $region8: #{up_forward.1} parent=0 // pred_region
    _
  $region9: #{up_forward.1} parent=0 // pred_fallthru
    _
  // Predicated region
  $region10: #{up_forward.1} parent=0 // pred_check
    _
  $region11: #{up_forward.1} parent=0 // pred_check_branch
    %19 = sbr.rel (0) target = $region13
  $region12: #{up_forward.1} parent=0 // pred_region
    _
  $region13: #{up_forward.1} parent=0 // pred_fallthru
    _
  // Predicated region
  $region14: #{up_forward.1} parent=0 // pred_check
    _
  $region15: #{up_forward.1} parent=0 // pred_check_branch
    %21 = sbr.rel (0) target = $region17
  $region16: #{up_forward.1} parent=0 // pred_region
    _
  $region17: #{up_forward.1} parent=0 // pred_fallthru
    _
  // Predicated region
  $region18: #{up_forward.1} parent=0 // pred_check
    _
  $region19: #{up_forward.1} parent=0 // pred_check_branch
    %23 = sbr.rel (0) target = $region21
  $region20: #{up_forward.1} parent=0 // pred_region
    _
  $region21: #{up_forward.1} parent=0 // pred_fallthru
    _
  // Predicated region
  $region22: #{up_forward.1} parent=0 // pred_check
    _
  $region23: #{up_forward.1} parent=0 // pred_check_branch
    %25 = sbr.rel (0) target = $region25
  $region24: #{up_forward.1} parent=0 // pred_region
    _
  $region25: #{up_forward.1} parent=0 // pred_fallthru
    _
  // Predicated region
  $region26: #{up_forward.1} parent=0 // pred_check
    _
  $region27: #{up_forward.1} parent=0 // pred_check_branch
    %27 = sbr.rel (0) target = $region29
  $region28: #{up_forward.1} parent=0 // pred_region
    _
  $region29: #{up_forward.1} parent=0 // pred_fallthru
    _
  // Predicated region
  $region30: #{up_forward.1} parent=0 // pred_check
    _
  $region31: #{up_forward.1} parent=0 // pred_check_branch
    %29 = sbr.rel (0) target = $region33
  $region32: #{up_forward.1} parent=0 // pred_region
    _
  $region33: #{up_forward.1} parent=0 // pred_fallthru
    _
  // Predicated region
  $region34: #{up_forward.1} parent=0 // pred_check
    _
  $region35: #{up_forward.1} parent=0 // pred_check_branch
    %31 = sbr.rel (0) target = $region37
  $region36: #{up_forward.1} parent=0 // pred_region
    _
  $region37: #{up_forward.1} parent=0 // pred_fallthru
    _
  %v33 = vld [vmem:[%s0] sm:$0xff]
  %v34 = vld [vmem:[%s1] sm:$0xff]
  %v35 = vld [vmem:[%s1 + $0x8] sm:$0xff]
  %v36 = vld [vmem:[%s1 + $0x10] sm:$0xff]
  %v37 = vld [vmem:[%s1 + $0x18] sm:$0xff]
  %v38 = vld [vmem:[%s1 + $0x20] sm:$0xff]
  %v39 = vld [vmem:[%s1 + $0x28] sm:$0xff]
  %v40 = vld [vmem:[%s1 + $0x30] sm:$0xff]
  %v41 = vld [vmem:[%s1 + $0x38] sm:$0xff]
  %v42 = vld [vmem:[%s1 + $0x40] sm:$0xff]
  %v43 = vld [vmem:[%s1 + $0x48] sm:$0xff]
  %v44 = vld [vmem:[%s1 + $0x50] sm:$0xff]
  %v45 = vld [vmem:[%s1 + $0x58] sm:$0xff]
  %v46 = vld [vmem:[%s1 + $0x60] sm:$0xff]
  %v47 = vld [vmem:[%s1 + $0x68] sm:$0xff]
  %v48 = vld [vmem:[%s1 + $0x70] sm:$0xff]
  %v49 = vld [vmem:[%s1 + $0x78] sm:$0xff]
  %v50 = vld [vmem:[%s1 + $0x80] sm:$0xff]
  %v51 = vld [vmem:[%s1 + $0x88] sm:$0xff]
  %v52 = vld [vmem:[%s1 + $0x90] sm:$0xff]
  %v53 = vld [vmem:[%s1 + $0x98] sm:$0xff]
  %v54 = vld [vmem:[%s1 + $0xa0] sm:$0xff]
  %v55 = vld [vmem:[%s1 + $0xa8] sm:$0xff]
  %v56 = vld [vmem:[%s1 + $0xb0] sm:$0xff]
  %v57 = vld [vmem:[%s1 + $0xb8] sm:$0xff]
  %v58 = vld [vmem:[%s1 + $0xc0] sm:$0xff]
  %v59 = vld [vmem:[%s1 + $0xc8] sm:$0xff]
  %v60 = vld [vmem:[%s1 + $0xd0] sm:$0xff]
  %v61 = vld [vmem:[%s1 + $0xd8] sm:$0xff]
  %v62 = vld [vmem:[%s1 + $0xe0] sm:$0xff]
  %v63 = vld [vmem:[%s1 + $0xe8] sm:$0xff]
  %v64 = vld [vmem:[%s1 + $0xf0] sm:$0xff]
  %v65 = vld [vmem:[%s1 + $0xf8] sm:$0xff]
  %v66 = vld [vmem:[%s1 + $0x100] sm:$0xff]
  %v67 = vld [vmem:[%s1 + $0x108] sm:$0xff]
  %v68 = vld [vmem:[%s1 + $0x110] sm:$0xff]
  %v69 = vld [vmem:[%s1 + $0x118] sm:$0xff]
  %v70 = vld [vmem:[%s1 + $0x120] sm:$0xff]
  %v71 = vld [vmem:[%s1 + $0x128] sm:$0xff]
  %v72 = vld [vmem:[%s1 + $0x130] sm:$0xff]
  %v73 = vld [vmem:[%s1 + $0x138] sm:$0xff]
  %v74 = vld [vmem:[%s1 + $0x140] sm:$0xff]
  %v75 = vld [vmem:[%s1 + $0x148] sm:$0xff]
  %v76 = vld [vmem:[%s1 + $0x150] sm:$0xff]
  %v77 = vld [vmem:[%s1 + $0x158] sm:$0xff]
  %v78 = vld [vmem:[%s1 + $0x160] sm:$0xff]
  %v79 = vld [vmem:[%s1 + $0x168] sm:$0xff]
  %v80 = vld [vmem:[%s1 + $0x170] sm:$0xff]
  %v81 = vld [vmem:[%s1 + $0x178] sm:$0xff]
  %v82 = vld [vmem:[%s1 + $0x180] sm:$0xff]
  %v83 = vld [vmem:[%s1 + $0x188] sm:$0xff]
  %v84 = vld [vmem:[%s1 + $0x190] sm:$0xff]
  %v85 = vld [vmem:[%s1 + $0x198] sm:$0xff]
  %v86 = vld [vmem:[%s1 + $0x1a0] sm:$0xff]
  %v87 = vld [vmem:[%s1 + $0x1a8] sm:$0xff]
  %v88 = vld [vmem:[%s1 + $0x1b0] sm:$0xff]
  %v89 = vld [vmem:[%s1 + $0x1b8] sm:$0xff]
  %v90 = vld [vmem:[%s1 + $0x1c0] sm:$0xff]
  %v91 = vld [vmem:[%s1 + $0x1c8] sm:$0xff]
  %v92 = vld [vmem:[%s1 + $0x1d0] sm:$0xff]
  %v93 = vld [vmem:[%s1 + $0x1d8] sm:$0xff]
  %v94 = vld [vmem:[%s1 + $0x1e0] sm:$0xff]
  %v95 = vld [vmem:[%s1 + $0x1e8] sm:$0xff]
  %v96 = vld [vmem:[%s1 + $0x1f0] sm:$0xff]
  %v97 = vld [vmem:[%s1 + $0x1f8] sm:$0xff]
  %v98 = vld [vmem:[%s1 + $0x200] sm:$0xff]
  %v99 = vld [vmem:[%s1 + $0x208] sm:$0xff]
  %v100 = vld [vmem:[%s1 + $0x210] sm:$0xff]
  %v101 = vld [vmem:[%s1 + $0x218] sm:$0xff]
  %v102 = vld [vmem:[%s1 + $0x220] sm:$0xff]
  %v103 = vld [vmem:[%s1 + $0x228] sm:$0xff]
  %v104 = vld [vmem:[%s1 + $0x230] sm:$0xff]
  %v105 = vld [vmem:[%s1 + $0x238] sm:$0xff]
  %v106 = vld [vmem:[%s1 + $0x240] sm:$0xff]
  %v107 = vld [vmem:[%s1 + $0x248] sm:$0xff]
  %v108 = vld [vmem:[%s1 + $0x250] sm:$0xff]
  %v109 = vld [vmem:[%s1 + $0x258] sm:$0xff]
  %v110 = vld [vmem:[%s1 + $0x260] sm:$0xff]
  %v111 = vld [vmem:[%s1 + $0x268] sm:$0xff]
  %v112 = vld [vmem:[%s1 + $0x270] sm:$0xff]
  %v113 = vld [vmem:[%s1 + $0x278] sm:$0xff]
  %v114 = vld [vmem:[%s1 + $0x280] sm:$0xff]
  %v115 = vld [vmem:[%s1 + $0x288] sm:$0xff]
  %v116 = vld [vmem:[%s1 + $0x290] sm:$0xff]
  %v117 = vld [vmem:[%s1 + $0x298] sm:$0xff]
  %v118 = vld [vmem:[%s1 + $0x2a0] sm:$0xff]
  %v119 = vld [vmem:[%s1 + $0x2a8] sm:$0xff]
  %v120 = vld [vmem:[%s1 + $0x2b0] sm:$0xff]
  %v121 = vld [vmem:[%s1 + $0x2b8] sm:$0xff]
  %v122 = vld [vmem:[%s1 + $0x2c0] sm:$0xff]
  %v123 = vld [vmem:[%s1 + $0x2c8] sm:$0xff]
  %v124 = vld [vmem:[%s1 + $0x2d0] sm:$0xff]
  %v125 = vld [vmem:[%s1 + $0x2d8] sm:$0xff]
  %v126 = vld [vmem:[%s1 + $0x2e0] sm:$0xff]
  %v127 = vld [vmem:[%s1 + $0x2e8] sm:$0xff]
  %v128 = vld [vmem:[%s1 + $0x2f0] sm:$0xff]
  %v129 = vld [vmem:[%s1 + $0x2f8] sm:$0xff]
  %130 = vmatprep.subr.mxu0 %v125
  %131 = vmatpush1.msra.mxu0 %v124
  %132 = vmatprep.subr.mxu0 %v119
  %133 = vmatpush1.msra.mxu0 %v118
  %134 = vmatprep.subr.mxu0 %v113
  %135 = vmatpush1.msra.mxu0 %v112
  %136 = vmatprep.subr.mxu0 %v107
  %137 = vmatpush1.msra.mxu0 %v106
  %138 = vmatprep.subr.mxu0 %v101
  %139 = vmatpush1.msra.mxu0 %v100
  %140 = vmatprep.subr.mxu0 %v95
  %141 = vmatpush1.msra.mxu0 %v94
  %142 = vmatprep.subr.mxu0 %v89
  %143 = vmatpush1.msra.mxu0 %v88
  %144 = vmatprep.subr.mxu0 %v83
  %145 = vmatpush1.msra.mxu0 %v82
  %146 = vmatprep.subr.mxu0 %v77
  %147 = vmatpush1.msra.mxu0 %v76
  %148 = vmatprep.subr.mxu0 %v71
  %149 = vmatpush1.msra.mxu0 %v70
  %150 = vmatprep.subr.mxu0 %v65
  %151 = vmatpush1.msra.mxu0 %v64
  %152 = vmatprep.subr.mxu0 %v59
  %153 = vmatpush1.msra.mxu0 %v58
  %154 = vmatprep.subr.mxu0 %v53
  %155 = vmatpush1.msra.mxu0 %v52
  %156 = vmatprep.subr.mxu0 %v47
  %157 = vmatpush1.msra.mxu0 %v46
  %158 = vmatprep.subr.mxu0 %v41
  %159 = vmatpush1.msra.mxu0 %v40
  %160 = vmatprep.subr.mxu0 %v35
  %161 = vmatpush1.msra.mxu0 %v34
  %162 = vmatprep.subr.mxu0 0.0
  %163 = vmatpush2.msra.mxu0 0.0
  %164 = vmatprep.subr.mxu0 0.0
  %165 = vmatpush2.msra.mxu0 0.0
  %166 = vmatprep.subr.mxu0 0.0
  %167 = vmatpush2.msra.mxu0 0.0
  %168 = vmatprep.subr.mxu0 0.0
  %169 = vmatpush2.msra.mxu0 0.0
  %170 = vmatprep.subr.mxu0 0.0
  %171 = vmatpush2.msra.mxu0 0.0
  %172 = vmatprep.subr.mxu0 0.0
  %173 = vmatpush2.msra.mxu0 0.0
  %174 = vmatprep.subr.mxu0 0.0
  %175 = vmatpush2.msra.mxu0 0.0
  %176 = vmatprep.subr.mxu0 0.0
  %177 = vmatpush2.msra.mxu0 0.0
  %178 = vmatprep.subr.mxu0 0.0
  %179 = vmatpush2.msra.mxu0 0.0
  %180 = vmatprep.subr.mxu0 0.0
  %181 = vmatpush2.msra.mxu0 0.0
  %182 = vmatprep.subr.mxu0 0.0
  %183 = vmatpush2.msra.mxu0 0.0
  %184 = vmatprep.subr.mxu0 0.0
  %185 = vmatpush2.msra.mxu0 0.0
  %186 = vmatprep.subr.mxu0 0.0
  %187 = vmatpush2.msra.mxu0 0.0
  %188 = vmatprep.subr.mxu0 0.0
  %189 = vmatpush2.msra.mxu0 0.0
  %190 = vmatprep.subr.mxu0 0.0
  %191 = vmatpush2.msra.mxu0 0.0
  %192 = vmatprep.subr.mxu0 0.0
  %193 = vmatpush2.msra.mxu0 0.0
  %194 = vmatprep.mubr.f32.mxu0 0.0
  %195 = vmatmul.mubr.f32.gmra.mxu0 %v33
  %v196 = vpop.f32.mrf.mxu0
  %v197 = vadd.f32 0.0, %v196
  %v198 = vpop.f32.mrf.mxu0
  %v199 = vadd.f32 0.0, %v198
  %200 = vdwg.mxu0
  %201 = vmatprep.subr.mxu0 %v127
  %202 = vmatpush1.msra.mxu0 %v126
  %203 = vmatprep.subr.mxu0 %v121
  %204 = vmatpush1.msra.mxu0 %v120
  %205 = vmatprep.subr.mxu0 %v115
  %206 = vmatpush1.msra.mxu0 %v114
  %207 = vmatprep.subr.mxu0 %v109
  %208 = vmatpush1.msra.mxu0 %v108
  %209 = vmatprep.subr.mxu0 %v103
  %210 = vmatpush1.msra.mxu0 %v102
  %211 = vmatprep.subr.mxu0 %v97
  %212 = vmatpush1.msra.mxu0 %v96
  %213 = vmatprep.subr.mxu0 %v91
  %214 = vmatpush1.msra.mxu0 %v90
  %215 = vmatprep.subr.mxu0 %v85
  %216 = vmatpush1.msra.mxu0 %v84
  %217 = vmatprep.subr.mxu0 %v79
  %218 = vmatpush1.msra.mxu0 %v78
  %219 = vmatprep.subr.mxu0 %v73
  %220 = vmatpush1.msra.mxu0 %v72
  %221 = vmatprep.subr.mxu0 %v67
  %222 = vmatpush1.msra.mxu0 %v66
  %223 = vmatprep.subr.mxu0 %v61
  %224 = vmatpush1.msra.mxu0 %v60
  %225 = vmatprep.subr.mxu0 %v55
  %226 = vmatpush1.msra.mxu0 %v54
  %227 = vmatprep.subr.mxu0 %v49
  %228 = vmatpush1.msra.mxu0 %v48
  %229 = vmatprep.subr.mxu0 %v43
  %230 = vmatpush1.msra.mxu0 %v42
  %231 = vmatprep.subr.mxu0 %v37
  %232 = vmatpush1.msra.mxu0 %v36
  %233 = vmatprep.subr.mxu0 0.0
  %234 = vmatpush2.msra.mxu0 0.0
  %235 = vmatprep.subr.mxu0 0.0
  %236 = vmatpush2.msra.mxu0 0.0
  %237 = vmatprep.subr.mxu0 0.0
  %238 = vmatpush2.msra.mxu0 0.0
  %239 = vmatprep.subr.mxu0 0.0
  %240 = vmatpush2.msra.mxu0 0.0
  %241 = vmatprep.subr.mxu0 0.0
  %242 = vmatpush2.msra.mxu0 0.0
  %243 = vmatprep.subr.mxu0 0.0
  %244 = vmatpush2.msra.mxu0 0.0
  %245 = vmatprep.subr.mxu0 0.0
  %246 = vmatpush2.msra.mxu0 0.0
  %247 = vmatprep.subr.mxu0 0.0
  %248 = vmatpush2.msra.mxu0 0.0
  %249 = vmatprep.subr.mxu0 0.0
  %250 = vmatpush2.msra.mxu0 0.0
  %251 = vmatprep.subr.mxu0 0.0
  %252 = vmatpush2.msra.mxu0 0.0
  %253 = vmatprep.subr.mxu0 0.0
  %254 = vmatpush2.msra.mxu0 0.0
  %255 = vmatprep.subr.mxu0 0.0
  %256 = vmatpush2.msra.mxu0 0.0
  %257 = vmatprep.subr.mxu0 0.0
  %258 = vmatpush2.msra.mxu0 0.0
  %259 = vmatprep.subr.mxu0 0.0
  %260 = vmatpush2.msra.mxu0 0.0
  %261 = vmatprep.subr.mxu0 0.0
  %262 = vmatpush2.msra.mxu0 0.0
  %263 = vmatprep.subr.mxu0 0.0
  %264 = vmatpush2.msra.mxu0 0.0
  %265 = vmatprep.mubr.f32.mxu0 0.0
  %266 = vmatmul.mubr.f32.gmra.mxu0 %v33
  %v267 = vpop.f32.mrf.mxu0
  %v268 = vadd.f32 0.0, %v267
  %v269 = vpop.f32.mrf.mxu0
  %v270 = vadd.f32 0.0, %v269
  %271 = vdwg.mxu0
  %272 = vmatprep.subr.mxu0 %v129
  %273 = vmatpush1.msra.mxu0 %v128
  %274 = vmatprep.subr.mxu0 %v123
  %275 = vmatpush1.msra.mxu0 %v122
  %276 = vmatprep.subr.mxu0 %v117
  %277 = vmatpush1.msra.mxu0 %v116
  %278 = vmatprep.subr.mxu0 %v111
  %279 = vmatpush1.msra.mxu0 %v110
  %280 = vmatprep.subr.mxu0 %v105
  %281 = vmatpush1.msra.mxu0 %v104
  %282 = vmatprep.subr.mxu0 %v99
  %283 = vmatpush1.msra.mxu0 %v98
  %284 = vmatprep.subr.mxu0 %v93
  %285 = vmatpush1.msra.mxu0 %v92
  %286 = vmatprep.subr.mxu0 %v87
  %287 = vmatpush1.msra.mxu0 %v86
  %288 = vmatprep.subr.mxu0 %v81
  %289 = vmatpush1.msra.mxu0 %v80
  %290 = vmatprep.subr.mxu0 %v75
  %291 = vmatpush1.msra.mxu0 %v74
  %292 = vmatprep.subr.mxu0 %v69
  %293 = vmatpush1.msra.mxu0 %v68
  %294 = vmatprep.subr.mxu0 %v63
  %295 = vmatpush1.msra.mxu0 %v62
  %296 = vmatprep.subr.mxu0 %v57
  %297 = vmatpush1.msra.mxu0 %v56
  %298 = vmatprep.subr.mxu0 %v51
  %299 = vmatpush1.msra.mxu0 %v50
  %300 = vmatprep.subr.mxu0 %v45
  %301 = vmatpush1.msra.mxu0 %v44
  %302 = vmatprep.subr.mxu0 %v39
  %303 = vmatpush1.msra.mxu0 %v38
  %304 = vmatprep.subr.mxu0 0.0
  %305 = vmatpush2.msra.mxu0 0.0
  %306 = vmatprep.subr.mxu0 0.0
  %307 = vmatpush2.msra.mxu0 0.0
  %308 = vmatprep.subr.mxu0 0.0
  %309 = vmatpush2.msra.mxu0 0.0
  %310 = vmatprep.subr.mxu0 0.0
  %311 = vmatpush2.msra.mxu0 0.0
  %312 = vmatprep.subr.mxu0 0.0
  %313 = vmatpush2.msra.mxu0 0.0
  %314 = vmatprep.subr.mxu0 0.0
  %315 = vmatpush2.msra.mxu0 0.0
  %316 = vmatprep.subr.mxu0 0.0
  %317 = vmatpush2.msra.mxu0 0.0
  %318 = vmatprep.subr.mxu0 0.0
  %319 = vmatpush2.msra.mxu0 0.0
  %320 = vmatprep.subr.mxu0 0.0
  %321 = vmatpush2.msra.mxu0 0.0
  %322 = vmatprep.subr.mxu0 0.0
  %323 = vmatpush2.msra.mxu0 0.0
  %324 = vmatprep.subr.mxu0 0.0
  %325 = vmatpush2.msra.mxu0 0.0
  %326 = vmatprep.subr.mxu0 0.0
  %327 = vmatpush2.msra.mxu0 0.0
  %328 = vmatprep.subr.mxu0 0.0
  %329 = vmatpush2.msra.mxu0 0.0
  %330 = vmatprep.subr.mxu0 0.0
  %331 = vmatpush2.msra.mxu0 0.0
  %332 = vmatprep.subr.mxu0 0.0
  %333 = vmatpush2.msra.mxu0 0.0
  %334 = vmatprep.subr.mxu0 0.0
  %335 = vmatpush2.msra.mxu0 0.0
  %336 = vmatprep.mubr.f32.mxu0 0.0
  %337 = vmatmul.mubr.f32.gmra.mxu0 %v33
  %v338 = vpop.f32.mrf.mxu0
  %v339 = vadd.f32 0.0, %v338
  %v340 = vpop.f32.mrf.mxu0
  %v341 = vadd.f32 0.0, %v340
  %342 = vdwg.mxu0
  %v343 = vld [vmem:[%s3] sm:$0x3]
  %v344 = vld [vmem:[%s4] sm:$0x1]
  %v345 = vld [vmem:[%s7] sm:$0x3f]
  %v346 = vpack.c.bf16 %v197, %v197
  %v347 = vpack.c.bf16 %v199, %v199
  %v348 = vpack.c.bf16 %v268, %v268
  %v349 = vpack.c.bf16 %v270, %v270
  %v350 = vpack.c.bf16 %v339, %v339
  %v351 = vpack.c.bf16 %v341, %v341
  %357 = vrot.lane.b32.xlu0 %v346, 19
  %v358 = vpop.permute.xlu0 %357
  %359 = vrot.lane.b32.xlu0 %v347, 19
  %v360 = vpop.permute.xlu0 %359
  %361 = vrot.lane.b32.xlu0 %v348, 19
  %v362 = vpop.permute.xlu0 %361
  %363 = vrot.lane.b32.xlu0 %v349, 19
  %v364 = vpop.permute.xlu0 %363
  %365 = vrot.lane.b32.xlu0 %v350, 19
  %v366 = vpop.permute.xlu0 %365
  %vm367 = vcmask 154624
  %v368 = vsel %vm367, %v358, %v360
  %v369 = vsel %vm367, %v360, %v362
  %v370 = vsel %vm367, %v362, %v364
  %v371 = vsel %vm367, %v364, %v366
  %vm372 = vcmask 154624
  %v375 = vsel %vm372, 0, %v358
  %376 = vrot.lane.b32.xlu0 %v346, 18
  %v377 = vpop.permute.xlu0 %376
  %378 = vrot.lane.b32.xlu0 %v347, 18
  %v379 = vpop.permute.xlu0 %378
  %380 = vrot.lane.b32.xlu0 %v348, 18
  %v381 = vpop.permute.xlu0 %380
  %382 = vrot.lane.b32.xlu0 %v349, 18
  %v383 = vpop.permute.xlu0 %382
  %384 = vrot.lane.b32.xlu0 %v350, 18
  %v385 = vpop.permute.xlu0 %384
  %vm386 = vcmask 146432
  %v387 = vsel %vm386, %v377, %v379
  %v388 = vsel %vm386, %v379, %v381
  %v389 = vsel %vm386, %v381, %v383
  %v390 = vsel %vm386, %v383, %v385
  %vm391 = vcmask 146432
  %v393 = vsel %vm391, 0, %v377
  %394 = vrot.lane.b32.xlu0 %v346, 17
  %v395 = vpop.permute.xlu0 %394
  %396 = vrot.lane.b32.xlu0 %v347, 17
  %v397 = vpop.permute.xlu0 %396
  %398 = vrot.lane.b32.xlu0 %v348, 17
  %v399 = vpop.permute.xlu0 %398
  %400 = vrot.lane.b32.xlu0 %v349, 17
  %v401 = vpop.permute.xlu0 %400
  %402 = vrot.lane.b32.xlu0 %v350, 17
  %v403 = vpop.permute.xlu0 %402
  %vm404 = vcmask 138240
  %v405 = vsel %vm404, %v395, %v397
  %v406 = vsel %vm404, %v397, %v399
  %v407 = vsel %vm404, %v399, %v401
  %v408 = vsel %vm404, %v401, %v403
  %vm409 = vcmask 138240
  %v411 = vsel %vm409, 0, %v395
  %413 = vrot.lane.b32.xlu0 %v346, 1
  %v414 = vpop.permute.xlu0 %413
  %415 = vrot.lane.b32.xlu0 %v347, 1
  %v416 = vpop.permute.xlu0 %415
  %417 = vrot.lane.b32.xlu0 %v348, 1
  %v418 = vpop.permute.xlu0 %417
  %419 = vrot.lane.b32.xlu0 %v349, 1
  %v420 = vpop.permute.xlu0 %419
  %421 = vrot.lane.b32.xlu0 %v350, 1
  %v422 = vpop.permute.xlu0 %421
  %423 = vrot.lane.b32.xlu0 %v351, 1
  %v424 = vpop.permute.xlu0 %423
  %vm425 = vcmask 7168
  %v426 = vsel %vm425, %v414, %v416
  %v427 = vsel %vm425, %v416, %v418
  %v428 = vsel %vm425, %v418, %v420
  %v429 = vsel %vm425, %v420, %v422
  %v430 = vsel %vm425, %v422, %v424
  %vm431 = vcmask 7168
  %v433 = vsel %vm431, 0, %v414
  %434 = vrot.lane.b32.xlu0 %v346, 127
  %v435 = vpop.permute.xlu0 %434
  %436 = vrot.lane.b32.xlu0 %v347, 127
  %v437 = vpop.permute.xlu0 %436
  %438 = vrot.lane.b32.xlu0 %v348, 127
  %v439 = vpop.permute.xlu0 %438
  %440 = vrot.lane.b32.xlu0 %v349, 127
  %v441 = vpop.permute.xlu0 %440
  %442 = vrot.lane.b32.xlu0 %v350, 127
  %v443 = vpop.permute.xlu0 %442
  %444 = vrot.lane.b32.xlu0 %v351, 127
  %v445 = vpop.permute.xlu0 %444
  %vm446 = vcmask 1039360
  %v447 = vsel %vm446, %v435, %v437
  %v448 = vsel %vm446, %v437, %v439
  %v449 = vsel %vm446, %v439, %v441
  %v450 = vsel %vm446, %v441, %v443
  %v451 = vsel %vm446, %v443, %v445
  %vm452 = vcmask 56320
  %v454 = vsel %vm452, %v445, 0
  %455 = vrot.lane.b32.xlu0 %v346, 111
  %v456 = vpop.permute.xlu0 %455
  %457 = vrot.lane.b32.xlu0 %v347, 111
  %v458 = vpop.permute.xlu0 %457
  %459 = vrot.lane.b32.xlu0 %v348, 111
  %v460 = vpop.permute.xlu0 %459
  %461 = vrot.lane.b32.xlu0 %v349, 111
  %v462 = vpop.permute.xlu0 %461
  %463 = vrot.lane.b32.xlu0 %v350, 111
  %v464 = vpop.permute.xlu0 %463
  %465 = vrot.lane.b32.xlu0 %v351, 111
  %v466 = vpop.permute.xlu0 %465
  %vm467 = vcmask 908288
  %v468 = vsel %vm467, %v456, %v458
  %v469 = vsel %vm467, %v458, %v460
  %v470 = vsel %vm467, %v460, %v462
  %v471 = vsel %vm467, %v462, %v464
  %v472 = vsel %vm467, %v464, %v466
  %vm473 = vcmask 973824
  %v475 = vsel %vm473, %v472, 0
  %476 = vrot.lane.b32.xlu0 %v346, 110
  %v477 = vpop.permute.xlu0 %476
  %478 = vrot.lane.b32.xlu0 %v347, 110
  %v479 = vpop.permute.xlu0 %478
  %480 = vrot.lane.b32.xlu0 %v348, 110
  %v481 = vpop.permute.xlu0 %480
  %482 = vrot.lane.b32.xlu0 %v349, 110
  %v483 = vpop.permute.xlu0 %482
  %484 = vrot.lane.b32.xlu0 %v350, 110
  %v485 = vpop.permute.xlu0 %484
  %486 = vrot.lane.b32.xlu0 %v351, 110
  %v487 = vpop.permute.xlu0 %486
  %vm488 = vcmask 900096
  %v489 = vsel %vm488, %v477, %v479
  %v490 = vsel %vm488, %v479, %v481
  %v491 = vsel %vm488, %v481, %v483
  %v492 = vsel %vm488, %v483, %v485
  %v493 = vsel %vm488, %v485, %v487
  %vm494 = vcmask 965632
  %v496 = vsel %vm494, %v493, 0
  %497 = vrot.lane.b32.xlu0 %v346, 109
  %v498 = vpop.permute.xlu0 %497
  %499 = vrot.lane.b32.xlu0 %v347, 109
  %v500 = vpop.permute.xlu0 %499
  %501 = vrot.lane.b32.xlu0 %v348, 109
  %v502 = vpop.permute.xlu0 %501
  %503 = vrot.lane.b32.xlu0 %v349, 109
  %v504 = vpop.permute.xlu0 %503
  %505 = vrot.lane.b32.xlu0 %v350, 109
  %v506 = vpop.permute.xlu0 %505
  %507 = vrot.lane.b32.xlu0 %v351, 109
  %v508 = vpop.permute.xlu0 %507
  %vm509 = vcmask 891904
  %v510 = vsel %vm509, %v498, %v500
  %v511 = vsel %vm509, %v500, %v502
  %v512 = vsel %vm509, %v502, %v504
  %v513 = vsel %vm509, %v504, %v506
  %v514 = vsel %vm509, %v506, %v508
  %vm515 = vcmask 957440
  %v517 = vsel %vm515, %v514, 0
  %v519 = vrot.slane %v393, 4
  %v520 = vrot.slane %v387, 4
  %v521 = vrot.slane %v388, 4
  %v522 = vrot.slane %v389, 4
  %v523 = vrot.slane %v390, 4
  %v524 = vrot.slane %v385, 4
  %v526 = vrot.slane %v433, 4
  %v527 = vrot.slane %v426, 4
  %v528 = vrot.slane %v427, 4
  %v529 = vrot.slane %v428, 4
  %v530 = vrot.slane %v429, 4
  %v531 = vrot.slane %v430, 4
  %v533 = vrot.slane %v447, 4
  %v534 = vrot.slane %v448, 4
  %v535 = vrot.slane %v449, 4
  %v536 = vrot.slane %v450, 4
  %v537 = vrot.slane %v451, 4
  %v538 = vrot.slane %v454, 4
  %v541 = vrot.slane %v489, 4
  %v542 = vrot.slane %v490, 4
  %v543 = vrot.slane %v491, 4
  %v544 = vrot.slane %v492, 4
  %v545 = vrot.slane %v496, 4
  %v546 = vrot.slane 0, 4
  %vm547 = vcmask 1043456
  %v549 = vsel %vm547, %v375, %v519
  %v553 = vsel %vm547, %v368, %v520
  %v557 = vsel %vm547, %v369, %v521
  %v561 = vsel %vm547, %v370, %v522
  %v565 = vsel %vm547, %v371, %v523
  %v569 = vsel %vm547, %v366, %v524
  %v572 = vsel %vm547, %v411, %v526
  %v576 = vsel %vm547, %v405, %v527
  %v580 = vsel %vm547, %v406, %v528
  %v584 = vsel %vm547, %v407, %v529
  %v588 = vsel %vm547, %v408, %v530
  %v592 = vsel %vm547, %v403, %v531
  %v596 = vsel %vm547, %v346, %v533
  %v600 = vsel %vm547, %v347, %v534
  %v604 = vsel %vm547, %v348, %v535
  %v608 = vsel %vm547, %v349, %v536
  %v612 = vsel %vm547, %v350, %v537
  %v616 = vsel %vm547, %v351, %v538
  %v620 = vsel %vm547, %v468, %v541
  %v624 = vsel %vm547, %v469, %v542
  %v628 = vsel %vm547, %v470, %v543
  %v632 = vsel %vm547, %v471, %v544
  %v635 = vsel %vm547, %v475, %v545
  %v638 = vsel %vm547, 0, %v546
  %vm640 = vcmask 588800
  %v642 = vsel %vm640, %v343, 0
  %v645 = vsel %vm547, %v510, 0
  %v648 = vsel %vm547, %v511, 0
  %v651 = vsel %vm547, %v512, 0
  %v654 = vsel %vm547, %v513, 0
  %v656 = vsel %vm547, %v517, 0
  %v658 = vsel %vm547, 0, 0
  %660 = vmatprep.subr.bf16.mxu0 0
  %661 = vmatpush1.bf16.msra.mxu0 0
  %662 = vmatprep.subr.bf16.mxu0 0
  %663 = vmatpush1.bf16.msra.mxu0 0
  %664 = vmatprep.subr.bf16.mxu0 0
  %665 = vmatpush1.bf16.msra.mxu0 0
  %666 = vmatprep.subr.bf16.mxu0 %v648
  %667 = vmatpush1.bf16.msra.mxu0 %v645
  %668 = vmatprep.subr.bf16.mxu0 %v624
  %669 = vmatpush1.bf16.msra.mxu0 %v620
  %670 = vmatprep.subr.bf16.mxu0 %v600
  %671 = vmatpush1.bf16.msra.mxu0 %v596
  %672 = vmatprep.subr.bf16.mxu0 %v576
  %673 = vmatpush1.bf16.msra.mxu0 %v572
  %674 = vmatprep.subr.bf16.mxu0 %v553
  %675 = vmatpush1.bf16.msra.mxu0 %v549
  %676 = vmatprep.subr.bf16.mxu0 0
  %677 = vmatpush2.bf16.msra.mxu0 0
  %678 = vmatprep.subr.bf16.mxu0 0
  %679 = vmatpush2.bf16.msra.mxu0 0
  %680 = vmatprep.subr.bf16.mxu0 0
  %681 = vmatpush2.bf16.msra.mxu0 0
  %682 = vmatprep.subr.bf16.mxu0 0
  %683 = vmatpush2.bf16.msra.mxu0 0
  %684 = vmatprep.subr.bf16.mxu0 0
  %685 = vmatpush2.bf16.msra.mxu0 0
  %686 = vmatprep.subr.bf16.mxu0 0
  %687 = vmatpush2.bf16.msra.mxu0 0
  %688 = vmatprep.subr.bf16.mxu0 0
  %689 = vmatpush2.bf16.msra.mxu0 0
  %690 = vmatprep.subr.bf16.mxu0 0
  %691 = vmatpush2.bf16.msra.mxu0 0
  %692 = vmatprep.mubr.bf16.mxu0 0
  %693 = vmatmul.mubr.bf16.gmra.mxu0 %v642
  %v694 = vpop.f32.mrf.mxu0
  %v695 = vadd.f32 0.0, %v694
  %v696 = vpop.f32.mrf.mxu0
  %v697 = vadd.f32 0.0, %v696
  %v698 = vpop.f32.mrf.mxu0
  %v699 = vpop.f32.mrf.mxu0
  %700 = vdwg.mxu0
  %701 = vmatprep.subr.bf16.mxu0 0
  %702 = vmatpush1.bf16.msra.mxu0 0
  %703 = vmatprep.subr.bf16.mxu0 0
  %704 = vmatpush1.bf16.msra.mxu0 0
  %705 = vmatprep.subr.bf16.mxu0 0
  %706 = vmatpush1.bf16.msra.mxu0 0
  %707 = vmatprep.subr.bf16.mxu0 %v654
  %708 = vmatpush1.bf16.msra.mxu0 %v651
  %709 = vmatprep.subr.bf16.mxu0 %v632
  %710 = vmatpush1.bf16.msra.mxu0 %v628
  %711 = vmatprep.subr.bf16.mxu0 %v608
  %712 = vmatpush1.bf16.msra.mxu0 %v604
  %713 = vmatprep.subr.bf16.mxu0 %v584
  %714 = vmatpush1.bf16.msra.mxu0 %v580
  %715 = vmatprep.subr.bf16.mxu0 %v561
  %716 = vmatpush1.bf16.msra.mxu0 %v557
  %717 = vmatprep.subr.bf16.mxu0 0
  %718 = vmatpush2.bf16.msra.mxu0 0
  %719 = vmatprep.subr.bf16.mxu0 0
  %720 = vmatpush2.bf16.msra.mxu0 0
  %721 = vmatprep.subr.bf16.mxu0 0
  %722 = vmatpush2.bf16.msra.mxu0 0
  %723 = vmatprep.subr.bf16.mxu0 0
  %724 = vmatpush2.bf16.msra.mxu0 0
  %725 = vmatprep.subr.bf16.mxu0 0
  %726 = vmatpush2.bf16.msra.mxu0 0
  %727 = vmatprep.subr.bf16.mxu0 0
  %728 = vmatpush2.bf16.msra.mxu0 0
  %729 = vmatprep.subr.bf16.mxu0 0
  %730 = vmatpush2.bf16.msra.mxu0 0
  %731 = vmatprep.subr.bf16.mxu0 0
  %732 = vmatpush2.bf16.msra.mxu0 0
  %733 = vmatprep.mubr.bf16.mxu0 0
  %734 = vmatmul.mubr.bf16.gmra.mxu0 %v642
  %v735 = vpop.f32.mrf.mxu0
  %v736 = vadd.f32 0.0, %v735
  %v737 = vpop.f32.mrf.mxu0
  %v738 = vadd.f32 0.0, %v737
  %v739 = vpop.f32.mrf.mxu0
  %v740 = vpop.f32.mrf.mxu0
  %741 = vdwg.mxu0
  %742 = vmatprep.subr.bf16.mxu0 0
  %743 = vmatpush1.bf16.msra.mxu0 0
  %744 = vmatprep.subr.bf16.mxu0 0
  %745 = vmatpush1.bf16.msra.mxu0 0
  %746 = vmatprep.subr.bf16.mxu0 0
  %747 = vmatpush1.bf16.msra.mxu0 0
  %748 = vmatprep.subr.bf16.mxu0 %v658
  %749 = vmatpush1.bf16.msra.mxu0 %v656
  %750 = vmatprep.subr.bf16.mxu0 %v638
  %751 = vmatpush1.bf16.msra.mxu0 %v635
  %752 = vmatprep.subr.bf16.mxu0 %v616
  %753 = vmatpush1.bf16.msra.mxu0 %v612
  %754 = vmatprep.subr.bf16.mxu0 %v592
  %755 = vmatpush1.bf16.msra.mxu0 %v588
  %756 = vmatprep.subr.bf16.mxu0 %v569
  %757 = vmatpush1.bf16.msra.mxu0 %v565
  %758 = vmatprep.subr.bf16.mxu0 0
  %759 = vmatpush2.bf16.msra.mxu0 0
  %760 = vmatprep.subr.bf16.mxu0 0
  %761 = vmatpush2.bf16.msra.mxu0 0
  %762 = vmatprep.subr.bf16.mxu0 0
  %763 = vmatpush2.bf16.msra.mxu0 0
  %764 = vmatprep.subr.bf16.mxu0 0
  %765 = vmatpush2.bf16.msra.mxu0 0
  %766 = vmatprep.subr.bf16.mxu0 0
  %767 = vmatpush2.bf16.msra.mxu0 0
  %768 = vmatprep.subr.bf16.mxu0 0
  %769 = vmatpush2.bf16.msra.mxu0 0
  %770 = vmatprep.subr.bf16.mxu0 0
  %771 = vmatpush2.bf16.msra.mxu0 0
  %772 = vmatprep.subr.bf16.mxu0 0
  %773 = vmatpush2.bf16.msra.mxu0 0
  %774 = vmatprep.mubr.bf16.mxu0 0
  %775 = vmatmul.mubr.bf16.gmra.mxu0 %v642
  %v776 = vpop.f32.mrf.mxu0
  %v777 = vadd.f32 0.0, %v776
  %v778 = vpop.f32.mrf.mxu0
  %v779 = vadd.f32 0.0, %v778
  %v780 = vpop.f32.mrf.mxu0
  %v781 = vpop.f32.mrf.mxu0
  %782 = vdwg.mxu0
  %v783 = vmax.f32 %v695, 0.0
  %v784 = vmax.f32 %v697, 0.0
  %v785 = vmax.f32 %v736, 0.0
  %v786 = vmax.f32 %v738, 0.0
  %v787 = vmax.f32 %v777, 0.0
  %v788 = vmax.f32 %v779, 0.0
  %v790 = vlaneseq
  %v791 = vshrl.u32 %v790, 7
  %v792 = vsub.s32 0, %v791
  %v793 = vrot.slane %v345, %v792
  %v794 = vlaneseq
  %v795 = vshrl.u32 %v794, 7
  %v796 = vsub.s32 1, %v795
  %v797 = vrot.slane %v345, %v796
  %v798 = vlaneseq
  %v799 = vshrl.u32 %v798, 7
  %v800 = vsub.s32 2, %v799
  %v801 = vrot.slane %v345, %v800
  %v802 = vlaneseq
  %v803 = vshrl.u32 %v802, 7
  %v804 = vsub.s32 3, %v803
  %v805 = vrot.slane %v345, %v804
  %v806 = vlaneseq
  %v807 = vshrl.u32 %v806, 7
  %v808 = vsub.s32 4, %v807
  %v809 = vrot.slane %v345, %v808
  %v810 = vlaneseq
  %v811 = vshrl.u32 %v810, 7
  %v812 = vsub.s32 5, %v811
  %v813 = vrot.slane %v345, %v812
  %v820 = vmul.f32 %v783, %v793
  %v821 = vmul.f32 %v784, %v797
  %v822 = vmul.f32 %v785, %v801
  %v823 = vmul.f32 %v786, %v805
  %v824 = vmul.f32 %v787, %v809
  %v825 = vmul.f32 %v788, %v813
  %v826 = vpack.c.bf16 %v820, %v820
  %v827 = vpack.c.bf16 %v821, %v821
  %v828 = vpack.c.bf16 %v822, %v822
  %v829 = vpack.c.bf16 %v823, %v823
  %v830 = vpack.c.bf16 %v824, %v824
  %v831 = vpack.c.bf16 %v825, %v825
  %837 = vrot.lane.b32.xlu0 %v826, 19
  %v838 = vpop.permute.xlu0 %837
  %839 = vrot.lane.b32.xlu0 %v827, 19
  %v840 = vpop.permute.xlu0 %839
  %841 = vrot.lane.b32.xlu0 %v828, 19
  %v842 = vpop.permute.xlu0 %841
  %843 = vrot.lane.b32.xlu0 %v829, 19
  %v844 = vpop.permute.xlu0 %843
  %845 = vrot.lane.b32.xlu0 %v830, 19
  %v846 = vpop.permute.xlu0 %845
  %v847 = vsel %vm367, %v838, %v840
  %v848 = vsel %vm367, %v840, %v842
  %v849 = vsel %vm367, %v842, %v844
  %v850 = vsel %vm367, %v844, %v846
  %v857 = vsel %vm372, 0, %v838
  %859 = vrot.lane.b32.xlu0 %v826, 18
  %v860 = vpop.permute.xlu0 %859
  %861 = vrot.lane.b32.xlu0 %v827, 18
  %v862 = vpop.permute.xlu0 %861
  %863 = vrot.lane.b32.xlu0 %v828, 18
  %v864 = vpop.permute.xlu0 %863
  %865 = vrot.lane.b32.xlu0 %v829, 18
  %v866 = vpop.permute.xlu0 %865
  %867 = vrot.lane.b32.xlu0 %v830, 18
  %v868 = vpop.permute.xlu0 %867
  %v869 = vsel %vm386, %v860, %v862
  %v870 = vsel %vm386, %v862, %v864
  %v871 = vsel %vm386, %v864, %v866
  %v872 = vsel %vm386, %v866, %v868
  %v874 = vsel %vm391, 0, %v860
  %875 = vrot.lane.b32.xlu0 %v826, 17
  %v876 = vpop.permute.xlu0 %875
  %877 = vrot.lane.b32.xlu0 %v827, 17
  %v878 = vpop.permute.xlu0 %877
  %879 = vrot.lane.b32.xlu0 %v828, 17
  %v880 = vpop.permute.xlu0 %879
  %881 = vrot.lane.b32.xlu0 %v829, 17
  %v882 = vpop.permute.xlu0 %881
  %883 = vrot.lane.b32.xlu0 %v830, 17
  %v884 = vpop.permute.xlu0 %883
  %v885 = vsel %vm404, %v876, %v878
  %v886 = vsel %vm404, %v878, %v880
  %v887 = vsel %vm404, %v880, %v882
  %v888 = vsel %vm404, %v882, %v884
  %v890 = vsel %vm409, 0, %v876
  %892 = vrot.lane.b32.xlu0 %v826, 1
  %v893 = vpop.permute.xlu0 %892
  %894 = vrot.lane.b32.xlu0 %v827, 1
  %v895 = vpop.permute.xlu0 %894
  %896 = vrot.lane.b32.xlu0 %v828, 1
  %v897 = vpop.permute.xlu0 %896
  %898 = vrot.lane.b32.xlu0 %v829, 1
  %v899 = vpop.permute.xlu0 %898
  %900 = vrot.lane.b32.xlu0 %v830, 1
  %v901 = vpop.permute.xlu0 %900
  %902 = vrot.lane.b32.xlu0 %v831, 1
  %v903 = vpop.permute.xlu0 %902
  %v904 = vsel %vm425, %v893, %v895
  %v905 = vsel %vm425, %v895, %v897
  %v906 = vsel %vm425, %v897, %v899
  %v907 = vsel %vm425, %v899, %v901
  %v908 = vsel %vm425, %v901, %v903
  %v910 = vsel %vm431, 0, %v893
  %911 = vrot.lane.b32.xlu0 %v826, 127
  %v912 = vpop.permute.xlu0 %911
  %913 = vrot.lane.b32.xlu0 %v827, 127
  %v914 = vpop.permute.xlu0 %913
  %915 = vrot.lane.b32.xlu0 %v828, 127
  %v916 = vpop.permute.xlu0 %915
  %917 = vrot.lane.b32.xlu0 %v829, 127
  %v918 = vpop.permute.xlu0 %917
  %919 = vrot.lane.b32.xlu0 %v830, 127
  %v920 = vpop.permute.xlu0 %919
  %921 = vrot.lane.b32.xlu0 %v831, 127
  %v922 = vpop.permute.xlu0 %921
  %v923 = vsel %vm446, %v912, %v914
  %v924 = vsel %vm446, %v914, %v916
  %v925 = vsel %vm446, %v916, %v918
  %v926 = vsel %vm446, %v918, %v920
  %v927 = vsel %vm446, %v920, %v922
  %v929 = vsel %vm452, %v922, 0
  %930 = vrot.lane.b32.xlu0 %v826, 111
  %v931 = vpop.permute.xlu0 %930
  %932 = vrot.lane.b32.xlu0 %v827, 111
  %v933 = vpop.permute.xlu0 %932
  %934 = vrot.lane.b32.xlu0 %v828, 111
  %v935 = vpop.permute.xlu0 %934
  %936 = vrot.lane.b32.xlu0 %v829, 111
  %v937 = vpop.permute.xlu0 %936
  %938 = vrot.lane.b32.xlu0 %v830, 111
  %v939 = vpop.permute.xlu0 %938
  %940 = vrot.lane.b32.xlu0 %v831, 111
  %v941 = vpop.permute.xlu0 %940
  %v942 = vsel %vm467, %v931, %v933
  %v943 = vsel %vm467, %v933, %v935
  %v944 = vsel %vm467, %v935, %v937
  %v945 = vsel %vm467, %v937, %v939
  %v946 = vsel %vm467, %v939, %v941
  %v948 = vsel %vm473, %v946, 0
  %949 = vrot.lane.b32.xlu0 %v826, 110
  %v950 = vpop.permute.xlu0 %949
  %951 = vrot.lane.b32.xlu0 %v827, 110
  %v952 = vpop.permute.xlu0 %951
  %953 = vrot.lane.b32.xlu0 %v828, 110
  %v954 = vpop.permute.xlu0 %953
  %955 = vrot.lane.b32.xlu0 %v829, 110
  %v956 = vpop.permute.xlu0 %955
  %957 = vrot.lane.b32.xlu0 %v830, 110
  %v958 = vpop.permute.xlu0 %957
  %959 = vrot.lane.b32.xlu0 %v831, 110
  %v960 = vpop.permute.xlu0 %959
  %v961 = vsel %vm488, %v950, %v952
  %v962 = vsel %vm488, %v952, %v954
  %v963 = vsel %vm488, %v954, %v956
  %v964 = vsel %vm488, %v956, %v958
  %v965 = vsel %vm488, %v958, %v960
  %v967 = vsel %vm494, %v965, 0
  %968 = vrot.lane.b32.xlu0 %v826, 109
  %v969 = vpop.permute.xlu0 %968
  %970 = vrot.lane.b32.xlu0 %v827, 109
  %v971 = vpop.permute.xlu0 %970
  %972 = vrot.lane.b32.xlu0 %v828, 109
  %v973 = vpop.permute.xlu0 %972
  %974 = vrot.lane.b32.xlu0 %v829, 109
  %v975 = vpop.permute.xlu0 %974
  %976 = vrot.lane.b32.xlu0 %v830, 109
  %v977 = vpop.permute.xlu0 %976
  %978 = vrot.lane.b32.xlu0 %v831, 109
  %v979 = vpop.permute.xlu0 %978
  %v980 = vsel %vm509, %v969, %v971
  %v981 = vsel %vm509, %v971, %v973
  %v982 = vsel %vm509, %v973, %v975
  %v983 = vsel %vm509, %v975, %v977
  %v984 = vsel %vm509, %v977, %v979
  %v986 = vsel %vm515, %v984, 0
  %v987 = vshll.u32 %v874, 16
  %v990 = vshll.u32 %v869, 16
  %v993 = vshll.u32 %v870, 16
  %v996 = vshll.u32 %v871, 16
  %v999 = vshll.u32 %v872, 16
  %v1002 = vshll.u32 %v868, 16
  %v1011 = vrot.slane %v890, 7
  %v1012 = vrot.slane %v885, 7
  %v1013 = vrot.slane %v886, 7
  %v1014 = vrot.slane %v887, 7
  %v1015 = vrot.slane %v888, 7
  %v1016 = vrot.slane %v884, 7
  %v1017 = vshll.u32 %v910, 16
  %v1019 = vrot.slane %v1017, 7
  %v1021 = vshll.u32 %v904, 16
  %v1023 = vrot.slane %v1021, 7
  %v1025 = vshll.u32 %v905, 16
  %v1027 = vrot.slane %v1025, 7
  %v1029 = vshll.u32 %v906, 16
  %v1031 = vrot.slane %v1029, 7
  %v1033 = vshll.u32 %v907, 16
  %v1035 = vrot.slane %v1033, 7
  %v1037 = vshll.u32 %v908, 16
  %v1039 = vrot.slane %v1037, 7
  %v1046 = vrot.slane %v826, 6
  %v1047 = vrot.slane %v827, 6
  %v1048 = vrot.slane %v828, 6
  %v1049 = vrot.slane %v829, 6
  %v1050 = vrot.slane %v830, 6
  %v1051 = vrot.slane %v831, 6
  %v1053 = vshll.u32 %v923, 16
  %v1055 = vrot.slane %v1053, 6
  %v1057 = vshll.u32 %v924, 16
  %v1059 = vrot.slane %v1057, 6
  %v1061 = vshll.u32 %v925, 16
  %v1063 = vrot.slane %v1061, 6
  %v1065 = vshll.u32 %v926, 16
  %v1067 = vrot.slane %v1065, 6
  %v1069 = vshll.u32 %v927, 16
  %v1071 = vrot.slane %v1069, 6
  %v1072 = vshll.u32 %v929, 16
  %v1074 = vrot.slane %v1072, 6
  %v1082 = vrot.slane %v942, 5
  %v1083 = vrot.slane %v943, 5
  %v1084 = vrot.slane %v944, 5
  %v1085 = vrot.slane %v945, 5
  %v1086 = vrot.slane %v948, 5
  %v1087 = vrot.slane 0, 5
  %v1089 = vshll.u32 %v961, 16
  %v1091 = vrot.slane %v1089, 5
  %v1093 = vshll.u32 %v962, 16
  %v1095 = vrot.slane %v1093, 5
  %v1097 = vshll.u32 %v963, 16
  %v1099 = vrot.slane %v1097, 5
  %v1101 = vshll.u32 %v964, 16
  %v1103 = vrot.slane %v1101, 5
  %v1104 = vshll.u32 %v967, 16
  %v1106 = vrot.slane %v1104, 5
  %v1107 = vshll.u32 0, 16
  %v1109 = vrot.slane %v1107, 5
  %v1117 = vrot.slane %v980, 4
  %v1118 = vrot.slane %v981, 4
  %v1119 = vrot.slane %v982, 4
  %v1120 = vrot.slane %v983, 4
  %v1121 = vrot.slane %v986, 4
  %vm1122 = vcmask 1040384
  %vm1123 = vsmask.f32 256
  %vm1124 = vmand %vm1122, %vm1123
  %v1125 = vsel %vm1124, %v857, %v987
  %v1126 = vsel %vm1124, %v847, %v990
  %v1127 = vsel %vm1124, %v848, %v993
  %v1128 = vsel %vm1124, %v849, %v996
  %v1129 = vsel %vm1124, %v850, %v999
  %v1130 = vsel %vm1124, %v846, %v1002
  %vm1131 = vcmask 1040384
  %v1134 = vsel %vm1131, %v1125, %v1011
  %v1138 = vsel %vm1131, %v1126, %v1012
  %v1142 = vsel %vm1131, %v1127, %v1013
  %v1146 = vsel %vm1131, %v1128, %v1014
  %v1150 = vsel %vm1131, %v1129, %v1015
  %v1154 = vsel %vm1131, %v1130, %v1016
  %vm1156 = vcmask 1041408
  %vm1157 = vsmask.f32 1280
  %vm1158 = vmand %vm1156, %vm1157
  %v1159 = vsel %vm1158, %v1134, %v1019
  %v1160 = vsel %vm1158, %v1138, %v1023
  %v1161 = vsel %vm1158, %v1142, %v1027
  %v1162 = vsel %vm1158, %v1146, %v1031
  %v1163 = vsel %vm1158, %v1150, %v1035
  %v1164 = vsel %vm1158, %v1154, %v1039
  %vm1165 = vcmask 1041408
  %v1168 = vsel %vm1165, %v1159, %v1046
  %v1172 = vsel %vm1165, %v1160, %v1047
  %v1176 = vsel %vm1165, %v1161, %v1048
  %v1180 = vsel %vm1165, %v1162, %v1049
  %v1184 = vsel %vm1165, %v1163, %v1050
  %v1188 = vsel %vm1165, %v1164, %v1051
  %vm1190 = vcmask 1042432
  %vm1191 = vsmask.f32 2304
  %vm1192 = vmand %vm1190, %vm1191
  %v1193 = vsel %vm1192, %v1168, %v1055
  %v1194 = vsel %vm1192, %v1172, %v1059
  %v1195 = vsel %vm1192, %v1176, %v1063
  %v1196 = vsel %vm1192, %v1180, %v1067
  %v1197 = vsel %vm1192, %v1184, %v1071
  %v1198 = vsel %vm1192, %v1188, %v1074
  %vm1199 = vcmask 1042432
  %v1202 = vsel %vm1199, %v1193, %v1082
  %v1206 = vsel %vm1199, %v1194, %v1083
  %v1210 = vsel %vm1199, %v1195, %v1084
  %v1214 = vsel %vm1199, %v1196, %v1085
  %v1218 = vsel %vm1199, %v1197, %v1086
  %v1222 = vsel %vm1199, %v1198, %v1087
  %vm1224 = vcmask 1043456
  %vm1225 = vsmask.f32 3328
  %vm1226 = vmand %vm1224, %vm1225
  %v1227 = vsel %vm1226, %v1202, %v1091
  %v1228 = vsel %vm1226, %v1206, %v1095
  %v1229 = vsel %vm1226, %v1210, %v1099
  %v1230 = vsel %vm1226, %v1214, %v1103
  %v1231 = vsel %vm1226, %v1218, %v1106
  %v1232 = vsel %vm1226, %v1222, %v1109
  %v1235 = vsel %vm547, %v1227, %v1117
  %v1238 = vsel %vm547, %v1228, %v1118
  %v1241 = vsel %vm547, %v1229, %v1119
  %v1244 = vsel %vm547, %v1230, %v1120
  %v1247 = vsel %vm547, %v1231, %v1121
  %v1249 = vsel %vm547, %v1232, %v546
  %vm1250 = vcmask 72704
  %v1252 = vsel %vm1250, %v344, 0
  %vm1254 = vcmask 1044480
  %v1255 = vsel %vm547, 4294967295, 65535
  %v1256 = vsel %vm1254, %v1255, 0
  %v1257 = vand.u32 %v1235, %v1256
  %v1259 = vand.u32 %v1238, %v1256
  %v1261 = vand.u32 %v1241, %v1256
  %v1263 = vand.u32 %v1244, %v1256
  %v1265 = vand.u32 %v1247, %v1256
  %v1267 = vand.u32 %v1249, %v1256
  %1269 = vmatprep.subr.bf16.mxu0 0
  %1270 = vmatpush1.bf16.msra.mxu0 0
  %1271 = vmatprep.subr.bf16.mxu0 0
  %1272 = vmatpush1.bf16.msra.mxu0 0
  %1273 = vmatprep.subr.bf16.mxu0 0
  %1274 = vmatpush1.bf16.msra.mxu0 0
  %1275 = vmatprep.subr.bf16.mxu0 0
  %1276 = vmatpush1.bf16.msra.mxu0 0
  %1277 = vmatprep.subr.bf16.mxu0 0
  %1278 = vmatpush1.bf16.msra.mxu0 0
  %1279 = vmatprep.subr.bf16.mxu0 0
  %1280 = vmatpush1.bf16.msra.mxu0 0
  %1281 = vmatprep.subr.bf16.mxu0 0
  %1282 = vmatpush1.bf16.msra.mxu0 0
  %1283 = vmatprep.subr.bf16.mxu0 %v1259
  %1284 = vmatpush1.bf16.msra.mxu0 %v1257
  %1285 = vmatprep.subr.bf16.mxu0 0
  %1286 = vmatpush2.bf16.msra.mxu0 0
  %1287 = vmatprep.subr.bf16.mxu0 0
  %1288 = vmatpush2.bf16.msra.mxu0 0
  %1289 = vmatprep.subr.bf16.mxu0 0
  %1290 = vmatpush2.bf16.msra.mxu0 0
  %1291 = vmatprep.subr.bf16.mxu0 0
  %1292 = vmatpush2.bf16.msra.mxu0 0
  %1293 = vmatprep.subr.bf16.mxu0 0
  %1294 = vmatpush2.bf16.msra.mxu0 0
  %1295 = vmatprep.subr.bf16.mxu0 0
  %1296 = vmatpush2.bf16.msra.mxu0 0
  %1297 = vmatprep.subr.bf16.mxu0 0
  %1298 = vmatpush2.bf16.msra.mxu0 0
  %1299 = vmatprep.subr.bf16.mxu0 0
  %1300 = vmatpush2.bf16.msra.mxu0 0
  %1301 = vmatprep.mubr.bf16.mxu0 0
  %1302 = vmatmul.mubr.bf16.gmra.mxu0 %v1252
  %v1303 = vpop.f32.mrf.mxu0
  %v1304 = vadd.f32 0.0, %v1303
  %v1305 = vpop.f32.mrf.mxu0
  %v1306 = vadd.f32 0.0, %v1305
  %v1307 = vpop.f32.mrf.mxu0
  %v1308 = vpop.f32.mrf.mxu0
  %1309 = vdwg.mxu0
  %1310 = vmatprep.subr.bf16.mxu0 0
  %1311 = vmatpush1.bf16.msra.mxu0 0
  %1312 = vmatprep.subr.bf16.mxu0 0
  %1313 = vmatpush1.bf16.msra.mxu0 0
  %1314 = vmatprep.subr.bf16.mxu0 0
  %1315 = vmatpush1.bf16.msra.mxu0 0
  %1316 = vmatprep.subr.bf16.mxu0 0
  %1317 = vmatpush1.bf16.msra.mxu0 0
  %1318 = vmatprep.subr.bf16.mxu0 0
  %1319 = vmatpush1.bf16.msra.mxu0 0
  %1320 = vmatprep.subr.bf16.mxu0 0
  %1321 = vmatpush1.bf16.msra.mxu0 0
  %1322 = vmatprep.subr.bf16.mxu0 0
  %1323 = vmatpush1.bf16.msra.mxu0 0
  %1324 = vmatprep.subr.bf16.mxu0 %v1263
  %1325 = vmatpush1.bf16.msra.mxu0 %v1261
  %1326 = vmatprep.subr.bf16.mxu0 0
  %1327 = vmatpush2.bf16.msra.mxu0 0
  %1328 = vmatprep.subr.bf16.mxu0 0
  %1329 = vmatpush2.bf16.msra.mxu0 0
  %1330 = vmatprep.subr.bf16.mxu0 0
  %1331 = vmatpush2.bf16.msra.mxu0 0
  %1332 = vmatprep.subr.bf16.mxu0 0
  %1333 = vmatpush2.bf16.msra.mxu0 0
  %1334 = vmatprep.subr.bf16.mxu0 0
  %1335 = vmatpush2.bf16.msra.mxu0 0
  %1336 = vmatprep.subr.bf16.mxu0 0
  %1337 = vmatpush2.bf16.msra.mxu0 0
  %1338 = vmatprep.subr.bf16.mxu0 0
  %1339 = vmatpush2.bf16.msra.mxu0 0
  %1340 = vmatprep.subr.bf16.mxu0 0
  %1341 = vmatpush2.bf16.msra.mxu0 0
  %1342 = vmatprep.mubr.bf16.mxu0 0
  %1343 = vmatmul.mubr.bf16.gmra.mxu0 %v1252
  %v1344 = vpop.f32.mrf.mxu0
  %v1345 = vadd.f32 0.0, %v1344
  %v1346 = vpop.f32.mrf.mxu0
  %v1347 = vadd.f32 0.0, %v1346
  %v1348 = vpop.f32.mrf.mxu0
  %v1349 = vpop.f32.mrf.mxu0
  %1350 = vdwg.mxu0
  %1351 = vmatprep.subr.bf16.mxu0 0
  %1352 = vmatpush1.bf16.msra.mxu0 0
  %1353 = vmatprep.subr.bf16.mxu0 0
  %1354 = vmatpush1.bf16.msra.mxu0 0
  %1355 = vmatprep.subr.bf16.mxu0 0
  %1356 = vmatpush1.bf16.msra.mxu0 0
  %1357 = vmatprep.subr.bf16.mxu0 0
  %1358 = vmatpush1.bf16.msra.mxu0 0
  %1359 = vmatprep.subr.bf16.mxu0 0
  %1360 = vmatpush1.bf16.msra.mxu0 0
  %1361 = vmatprep.subr.bf16.mxu0 0
  %1362 = vmatpush1.bf16.msra.mxu0 0
  %1363 = vmatprep.subr.bf16.mxu0 0
  %1364 = vmatpush1.bf16.msra.mxu0 0
  %1365 = vmatprep.subr.bf16.mxu0 %v1267
  %1366 = vmatpush1.bf16.msra.mxu0 %v1265
  %1367 = vmatprep.subr.bf16.mxu0 0
  %1368 = vmatpush2.bf16.msra.mxu0 0
  %1369 = vmatprep.subr.bf16.mxu0 0
  %1370 = vmatpush2.bf16.msra.mxu0 0
  %1371 = vmatprep.subr.bf16.mxu0 0
  %1372 = vmatpush2.bf16.msra.mxu0 0
  %1373 = vmatprep.subr.bf16.mxu0 0
  %1374 = vmatpush2.bf16.msra.mxu0 0
  %1375 = vmatprep.subr.bf16.mxu0 0
  %1376 = vmatpush2.bf16.msra.mxu0 0
  %1377 = vmatprep.subr.bf16.mxu0 0
  %1378 = vmatpush2.bf16.msra.mxu0 0
  %1379 = vmatprep.subr.bf16.mxu0 0
  %1380 = vmatpush2.bf16.msra.mxu0 0
  %1381 = vmatprep.subr.bf16.mxu0 0
  %1382 = vmatpush2.bf16.msra.mxu0 0
  %1383 = vmatprep.mubr.bf16.mxu0 0
  %1384 = vmatmul.mubr.bf16.gmra.mxu0 %v1252
  %v1385 = vpop.f32.mrf.mxu0
  %v1386 = vadd.f32 0.0, %v1385
  %v1387 = vpop.f32.mrf.mxu0
  %v1388 = vadd.f32 0.0, %v1387
  %v1389 = vpop.f32.mrf.mxu0
  %v1390 = vpop.f32.mrf.mxu0
  %1391 = vdwg.mxu0
  %v1392 = vmax.f32 %v1304, 0.0
  %v1393 = vmax.f32 %v1306, 0.0
  %v1394 = vmax.f32 %v1345, 0.0
  %v1395 = vmax.f32 %v1347, 0.0
  %v1396 = vmax.f32 %v1386, 0.0
  %v1397 = vmax.f32 %v1388, 0.0
  %v1398 = vmul.f32 %v1392, %v793
  %v1399 = vmul.f32 %v1393, %v797
  %v1400 = vmul.f32 %v1394, %v801
  %v1401 = vmul.f32 %v1395, %v805
  %v1402 = vmul.f32 %v1396, %v809
  %v1403 = vmul.f32 %v1397, %v813
  %v1404 = vsel %vm1131, %v1398, %v820
  %v1405 = vsel %vm1131, %v1399, %v821
  %v1406 = vsel %vm1131, %v1400, %v822
  %v1407 = vsel %vm1131, %v1401, %v823
  %v1408 = vsel %vm1131, %v1402, %v824
  %v1409 = vsel %vm1131, %v1403, %v825
  %v1410 = vld [vmem:[%s2] sm:$0xff]
  %v1411 = vld [vmem:[%s2 + $0x8] sm:$0xff]
  %v1412 = vld [vmem:[%s2 + $0x10] sm:$0xff]
  %v1416 = vcombine.high %v1410, %v1410
  %v1417 = vcombine.high %v1411, %v1411
  %v1418 = vcombine.high %v1412, %v1412
  %v1428 = vrot.slane %v1404, 4
  %v1429 = vrot.slane %v1405, 4
  %v1430 = vrot.slane %v1406, 4
  %v1431 = vrot.slane %v1407, 4
  %v1432 = vrot.slane %v1408, 4
  %v1433 = vrot.slane %v1409, 4
  %v1440 = vsel %vm547, %v1410, %v1428
  %v1441 = vsel %vm547, %v1416, %v1429
  %v1442 = vsel %vm547, %v1411, %v1430
  %v1443 = vsel %vm547, %v1417, %v1431
  %v1444 = vsel %vm547, %v1412, %v1432
  %v1445 = vsel %vm547, %v1418, %v1433
  %v1446 = vld [vmem:[%s5] sm:$0x3]
  %v1447 = vld [vmem:[%s6] sm:$0x1]
  %v1448 = vld [vmem:[%s8] sm:$0x3f]
  %v1449 = vpack.c.bf16 %v1440, %v1440
  %v1450 = vpack.c.bf16 %v1441, %v1441
  %v1451 = vpack.c.bf16 %v1442, %v1442
  %v1452 = vpack.c.bf16 %v1443, %v1443
  %v1453 = vpack.c.bf16 %v1444, %v1444
  %v1454 = vpack.c.bf16 %v1445, %v1445
  %1460 = vrot.lane.b32.xlu0 %v1449, 19
  %v1461 = vpop.permute.xlu0 %1460
  %1462 = vrot.lane.b32.xlu0 %v1450, 19
  %v1463 = vpop.permute.xlu0 %1462
  %1464 = vrot.lane.b32.xlu0 %v1451, 19
  %v1465 = vpop.permute.xlu0 %1464
  %1466 = vrot.lane.b32.xlu0 %v1452, 19
  %v1467 = vpop.permute.xlu0 %1466
  %1468 = vrot.lane.b32.xlu0 %v1453, 19
  %v1469 = vpop.permute.xlu0 %1468
  %v1470 = vsel %vm367, %v1461, %v1463
  %v1471 = vsel %vm367, %v1463, %v1465
  %v1472 = vsel %vm367, %v1465, %v1467
  %v1473 = vsel %vm367, %v1467, %v1469
  %v1475 = vsel %vm372, 0, %v1461
  %1476 = vrot.lane.b32.xlu0 %v1449, 18
  %v1477 = vpop.permute.xlu0 %1476
  %1478 = vrot.lane.b32.xlu0 %v1450, 18
  %v1479 = vpop.permute.xlu0 %1478
  %1480 = vrot.lane.b32.xlu0 %v1451, 18
  %v1481 = vpop.permute.xlu0 %1480
  %1482 = vrot.lane.b32.xlu0 %v1452, 18
  %v1483 = vpop.permute.xlu0 %1482
  %1484 = vrot.lane.b32.xlu0 %v1453, 18
  %v1485 = vpop.permute.xlu0 %1484
  %v1486 = vsel %vm386, %v1477, %v1479
  %v1487 = vsel %vm386, %v1479, %v1481
  %v1488 = vsel %vm386, %v1481, %v1483
  %v1489 = vsel %vm386, %v1483, %v1485
  %v1491 = vsel %vm391, 0, %v1477
  %1492 = vrot.lane.b32.xlu0 %v1449, 17
  %v1493 = vpop.permute.xlu0 %1492
  %1494 = vrot.lane.b32.xlu0 %v1450, 17
  %v1495 = vpop.permute.xlu0 %1494
  %1496 = vrot.lane.b32.xlu0 %v1451, 17
  %v1497 = vpop.permute.xlu0 %1496
  %1498 = vrot.lane.b32.xlu0 %v1452, 17
  %v1499 = vpop.permute.xlu0 %1498
  %1500 = vrot.lane.b32.xlu0 %v1453, 17
  %v1501 = vpop.permute.xlu0 %1500
  %v1502 = vsel %vm404, %v1493, %v1495
  %v1503 = vsel %vm404, %v1495, %v1497
  %v1504 = vsel %vm404, %v1497, %v1499
  %v1505 = vsel %vm404, %v1499, %v1501
  %v1507 = vsel %vm409, 0, %v1493
  %1509 = vrot.lane.b32.xlu0 %v1449, 1
  %v1510 = vpop.permute.xlu0 %1509
  %1511 = vrot.lane.b32.xlu0 %v1450, 1
  %v1512 = vpop.permute.xlu0 %1511
  %1513 = vrot.lane.b32.xlu0 %v1451, 1
  %v1514 = vpop.permute.xlu0 %1513
  %1515 = vrot.lane.b32.xlu0 %v1452, 1
  %v1516 = vpop.permute.xlu0 %1515
  %1517 = vrot.lane.b32.xlu0 %v1453, 1
  %v1518 = vpop.permute.xlu0 %1517
  %1519 = vrot.lane.b32.xlu0 %v1454, 1
  %v1520 = vpop.permute.xlu0 %1519
  %v1521 = vsel %vm425, %v1510, %v1512
  %v1522 = vsel %vm425, %v1512, %v1514
  %v1523 = vsel %vm425, %v1514, %v1516
  %v1524 = vsel %vm425, %v1516, %v1518
  %v1525 = vsel %vm425, %v1518, %v1520
  %v1527 = vsel %vm431, 0, %v1510
  %1528 = vrot.lane.b32.xlu0 %v1449, 127
  %v1529 = vpop.permute.xlu0 %1528
  %1530 = vrot.lane.b32.xlu0 %v1450, 127
  %v1531 = vpop.permute.xlu0 %1530
  %1532 = vrot.lane.b32.xlu0 %v1451, 127
  %v1533 = vpop.permute.xlu0 %1532
  %1534 = vrot.lane.b32.xlu0 %v1452, 127
  %v1535 = vpop.permute.xlu0 %1534
  %1536 = vrot.lane.b32.xlu0 %v1453, 127
  %v1537 = vpop.permute.xlu0 %1536
  %1538 = vrot.lane.b32.xlu0 %v1454, 127
  %v1539 = vpop.permute.xlu0 %1538
  %v1540 = vsel %vm446, %v1529, %v1531
  %v1541 = vsel %vm446, %v1531, %v1533
  %v1542 = vsel %vm446, %v1533, %v1535
  %v1543 = vsel %vm446, %v1535, %v1537
  %v1544 = vsel %vm446, %v1537, %v1539
  %v1546 = vsel %vm452, %v1539, 0
  %1547 = vrot.lane.b32.xlu0 %v1449, 111
  %v1548 = vpop.permute.xlu0 %1547
  %1549 = vrot.lane.b32.xlu0 %v1450, 111
  %v1550 = vpop.permute.xlu0 %1549
  %1551 = vrot.lane.b32.xlu0 %v1451, 111
  %v1552 = vpop.permute.xlu0 %1551
  %1553 = vrot.lane.b32.xlu0 %v1452, 111
  %v1554 = vpop.permute.xlu0 %1553
  %1555 = vrot.lane.b32.xlu0 %v1453, 111
  %v1556 = vpop.permute.xlu0 %1555
  %1557 = vrot.lane.b32.xlu0 %v1454, 111
  %v1558 = vpop.permute.xlu0 %1557
  %v1559 = vsel %vm467, %v1548, %v1550
  %v1560 = vsel %vm467, %v1550, %v1552
  %v1561 = vsel %vm467, %v1552, %v1554
  %v1562 = vsel %vm467, %v1554, %v1556
  %v1563 = vsel %vm467, %v1556, %v1558
  %v1565 = vsel %vm473, %v1563, 0
  %1566 = vrot.lane.b32.xlu0 %v1449, 110
  %v1567 = vpop.permute.xlu0 %1566
  %1568 = vrot.lane.b32.xlu0 %v1450, 110
  %v1569 = vpop.permute.xlu0 %1568
  %1570 = vrot.lane.b32.xlu0 %v1451, 110
  %v1571 = vpop.permute.xlu0 %1570
  %1572 = vrot.lane.b32.xlu0 %v1452, 110
  %v1573 = vpop.permute.xlu0 %1572
  %1574 = vrot.lane.b32.xlu0 %v1453, 110
  %v1575 = vpop.permute.xlu0 %1574
  %1576 = vrot.lane.b32.xlu0 %v1454, 110
  %v1577 = vpop.permute.xlu0 %1576
  %v1578 = vsel %vm488, %v1567, %v1569
  %v1579 = vsel %vm488, %v1569, %v1571
  %v1580 = vsel %vm488, %v1571, %v1573
  %v1581 = vsel %vm488, %v1573, %v1575
  %v1582 = vsel %vm488, %v1575, %v1577
  %v1584 = vsel %vm494, %v1582, 0
  %1585 = vrot.lane.b32.xlu0 %v1449, 109
  %v1586 = vpop.permute.xlu0 %1585
  %1587 = vrot.lane.b32.xlu0 %v1450, 109
  %v1588 = vpop.permute.xlu0 %1587
  %1589 = vrot.lane.b32.xlu0 %v1451, 109
  %v1590 = vpop.permute.xlu0 %1589
  %1591 = vrot.lane.b32.xlu0 %v1452, 109
  %v1592 = vpop.permute.xlu0 %1591
  %1593 = vrot.lane.b32.xlu0 %v1453, 109
  %v1594 = vpop.permute.xlu0 %1593
  %1595 = vrot.lane.b32.xlu0 %v1454, 109
  %v1596 = vpop.permute.xlu0 %1595
  %v1597 = vsel %vm509, %v1586, %v1588
  %v1598 = vsel %vm509, %v1588, %v1590
  %v1599 = vsel %vm509, %v1590, %v1592
  %v1600 = vsel %vm509, %v1592, %v1594
  %v1601 = vsel %vm509, %v1594, %v1596
  %v1603 = vsel %vm515, %v1601, 0
  %v1605 = vrot.slane %v1491, 4
  %v1606 = vrot.slane %v1486, 4
  %v1607 = vrot.slane %v1487, 4
  %v1608 = vrot.slane %v1488, 4
  %v1609 = vrot.slane %v1489, 4
  %v1610 = vrot.slane %v1485, 4
  %v1612 = vrot.slane %v1527, 4
  %v1613 = vrot.slane %v1521, 4
  %v1614 = vrot.slane %v1522, 4
  %v1615 = vrot.slane %v1523, 4
  %v1616 = vrot.slane %v1524, 4
  %v1617 = vrot.slane %v1525, 4
  %v1619 = vrot.slane %v1540, 4
  %v1620 = vrot.slane %v1541, 4
  %v1621 = vrot.slane %v1542, 4
  %v1622 = vrot.slane %v1543, 4
  %v1623 = vrot.slane %v1544, 4
  %v1624 = vrot.slane %v1546, 4
  %v1626 = vrot.slane %v1578, 4
  %v1627 = vrot.slane %v1579, 4
  %v1628 = vrot.slane %v1580, 4
  %v1629 = vrot.slane %v1581, 4
  %v1630 = vrot.slane %v1584, 4
  %v1632 = vsel %vm547, %v1475, %v1605
  %v1636 = vsel %vm547, %v1470, %v1606
  %v1640 = vsel %vm547, %v1471, %v1607
  %v1644 = vsel %vm547, %v1472, %v1608
  %v1648 = vsel %vm547, %v1473, %v1609
  %v1652 = vsel %vm547, %v1469, %v1610
  %v1655 = vsel %vm547, %v1507, %v1612
  %v1659 = vsel %vm547, %v1502, %v1613
  %v1663 = vsel %vm547, %v1503, %v1614
  %v1667 = vsel %vm547, %v1504, %v1615
  %v1671 = vsel %vm547, %v1505, %v1616
  %v1675 = vsel %vm547, %v1501, %v1617
  %v1679 = vsel %vm547, %v1449, %v1619
  %v1683 = vsel %vm547, %v1450, %v1620
  %v1687 = vsel %vm547, %v1451, %v1621
  %v1691 = vsel %vm547, %v1452, %v1622
  %v1695 = vsel %vm547, %v1453, %v1623
  %v1699 = vsel %vm547, %v1454, %v1624
  %v1703 = vsel %vm547, %v1559, %v1626
  %v1707 = vsel %vm547, %v1560, %v1627
  %v1711 = vsel %vm547, %v1561, %v1628
  %v1715 = vsel %vm547, %v1562, %v1629
  %v1718 = vsel %vm547, %v1565, %v1630
  %v1721 = vsel %vm640, %v1446, 0
  %v1724 = vsel %vm547, %v1597, 0
  %v1727 = vsel %vm547, %v1598, 0
  %v1730 = vsel %vm547, %v1599, 0
  %v1733 = vsel %vm547, %v1600, 0
  %v1735 = vsel %vm547, %v1603, 0
  %1737 = vmatprep.subr.bf16.mxu0 0
  %1738 = vmatpush1.bf16.msra.mxu0 0
  %1739 = vmatprep.subr.bf16.mxu0 0
  %1740 = vmatpush1.bf16.msra.mxu0 0
  %1741 = vmatprep.subr.bf16.mxu0 0
  %1742 = vmatpush1.bf16.msra.mxu0 0
  %1743 = vmatprep.subr.bf16.mxu0 %v1727
  %1744 = vmatpush1.bf16.msra.mxu0 %v1724
  %1745 = vmatprep.subr.bf16.mxu0 %v1707
  %1746 = vmatpush1.bf16.msra.mxu0 %v1703
  %1747 = vmatprep.subr.bf16.mxu0 %v1683
  %1748 = vmatpush1.bf16.msra.mxu0 %v1679
  %1749 = vmatprep.subr.bf16.mxu0 %v1659
  %1750 = vmatpush1.bf16.msra.mxu0 %v1655
  %1751 = vmatprep.subr.bf16.mxu0 %v1636
  %1752 = vmatpush1.bf16.msra.mxu0 %v1632
  %1753 = vmatprep.subr.bf16.mxu0 0
  %1754 = vmatpush2.bf16.msra.mxu0 0
  %1755 = vmatprep.subr.bf16.mxu0 0
  %1756 = vmatpush2.bf16.msra.mxu0 0
  %1757 = vmatprep.subr.bf16.mxu0 0
  %1758 = vmatpush2.bf16.msra.mxu0 0
  %1759 = vmatprep.subr.bf16.mxu0 0
  %1760 = vmatpush2.bf16.msra.mxu0 0
  %1761 = vmatprep.subr.bf16.mxu0 0
  %1762 = vmatpush2.bf16.msra.mxu0 0
  %1763 = vmatprep.subr.bf16.mxu0 0
  %1764 = vmatpush2.bf16.msra.mxu0 0
  %1765 = vmatprep.subr.bf16.mxu0 0
  %1766 = vmatpush2.bf16.msra.mxu0 0
  %1767 = vmatprep.subr.bf16.mxu0 0
  %1768 = vmatpush2.bf16.msra.mxu0 0
  %1769 = vmatprep.mubr.bf16.mxu0 0
  %1770 = vmatmul.mubr.bf16.gmra.mxu0 %v1721
  %v1771 = vpop.f32.mrf.mxu0
  %v1772 = vadd.f32 0.0, %v1771
  %v1773 = vpop.f32.mrf.mxu0
  %v1774 = vadd.f32 0.0, %v1773
  %v1775 = vpop.f32.mrf.mxu0
  %v1776 = vpop.f32.mrf.mxu0
  %1777 = vdwg.mxu0
  %1778 = vmatprep.subr.bf16.mxu0 0
  %1779 = vmatpush1.bf16.msra.mxu0 0
  %1780 = vmatprep.subr.bf16.mxu0 0
  %1781 = vmatpush1.bf16.msra.mxu0 0
  %1782 = vmatprep.subr.bf16.mxu0 0
  %1783 = vmatpush1.bf16.msra.mxu0 0
  %1784 = vmatprep.subr.bf16.mxu0 %v1733
  %1785 = vmatpush1.bf16.msra.mxu0 %v1730
  %1786 = vmatprep.subr.bf16.mxu0 %v1715
  %1787 = vmatpush1.bf16.msra.mxu0 %v1711
  %1788 = vmatprep.subr.bf16.mxu0 %v1691
  %1789 = vmatpush1.bf16.msra.mxu0 %v1687
  %1790 = vmatprep.subr.bf16.mxu0 %v1667
  %1791 = vmatpush1.bf16.msra.mxu0 %v1663
  %1792 = vmatprep.subr.bf16.mxu0 %v1644
  %1793 = vmatpush1.bf16.msra.mxu0 %v1640
  %1794 = vmatprep.subr.bf16.mxu0 0
  %1795 = vmatpush2.bf16.msra.mxu0 0
  %1796 = vmatprep.subr.bf16.mxu0 0
  %1797 = vmatpush2.bf16.msra.mxu0 0
  %1798 = vmatprep.subr.bf16.mxu0 0
  %1799 = vmatpush2.bf16.msra.mxu0 0
  %1800 = vmatprep.subr.bf16.mxu0 0
  %1801 = vmatpush2.bf16.msra.mxu0 0
  %1802 = vmatprep.subr.bf16.mxu0 0
  %1803 = vmatpush2.bf16.msra.mxu0 0
  %1804 = vmatprep.subr.bf16.mxu0 0
  %1805 = vmatpush2.bf16.msra.mxu0 0
  %1806 = vmatprep.subr.bf16.mxu0 0
  %1807 = vmatpush2.bf16.msra.mxu0 0
  %1808 = vmatprep.subr.bf16.mxu0 0
  %1809 = vmatpush2.bf16.msra.mxu0 0
  %1810 = vmatprep.mubr.bf16.mxu0 0
  %1811 = vmatmul.mubr.bf16.gmra.mxu0 %v1721
  %v1812 = vpop.f32.mrf.mxu0
  %v1813 = vadd.f32 0.0, %v1812
  %v1814 = vpop.f32.mrf.mxu0
  %v1815 = vadd.f32 0.0, %v1814
  %v1816 = vpop.f32.mrf.mxu0
  %v1817 = vpop.f32.mrf.mxu0
  %1818 = vdwg.mxu0
  %1819 = vmatprep.subr.bf16.mxu0 0
  %1820 = vmatpush1.bf16.msra.mxu0 0
  %1821 = vmatprep.subr.bf16.mxu0 0
  %1822 = vmatpush1.bf16.msra.mxu0 0
  %1823 = vmatprep.subr.bf16.mxu0 0
  %1824 = vmatpush1.bf16.msra.mxu0 0
  %1825 = vmatprep.subr.bf16.mxu0 %v658
  %1826 = vmatpush1.bf16.msra.mxu0 %v1735
  %1827 = vmatprep.subr.bf16.mxu0 %v638
  %1828 = vmatpush1.bf16.msra.mxu0 %v1718
  %1829 = vmatprep.subr.bf16.mxu0 %v1699
  %1830 = vmatpush1.bf16.msra.mxu0 %v1695
  %1831 = vmatprep.subr.bf16.mxu0 %v1675
  %1832 = vmatpush1.bf16.msra.mxu0 %v1671
  %1833 = vmatprep.subr.bf16.mxu0 %v1652
  %1834 = vmatpush1.bf16.msra.mxu0 %v1648
  %1835 = vmatprep.subr.bf16.mxu0 0
  %1836 = vmatpush2.bf16.msra.mxu0 0
  %1837 = vmatprep.subr.bf16.mxu0 0
  %1838 = vmatpush2.bf16.msra.mxu0 0
  %1839 = vmatprep.subr.bf16.mxu0 0
  %1840 = vmatpush2.bf16.msra.mxu0 0
  %1841 = vmatprep.subr.bf16.mxu0 0
  %1842 = vmatpush2.bf16.msra.mxu0 0
  %1843 = vmatprep.subr.bf16.mxu0 0
  %1844 = vmatpush2.bf16.msra.mxu0 0
  %1845 = vmatprep.subr.bf16.mxu0 0
  %1846 = vmatpush2.bf16.msra.mxu0 0
  %1847 = vmatprep.subr.bf16.mxu0 0
  %1848 = vmatpush2.bf16.msra.mxu0 0
  %1849 = vmatprep.subr.bf16.mxu0 0
  %1850 = vmatpush2.bf16.msra.mxu0 0
  %1851 = vmatprep.mubr.bf16.mxu0 0
  %1852 = vmatmul.mubr.bf16.gmra.mxu0 %v1721
  %v1853 = vpop.f32.mrf.mxu0
  %v1854 = vadd.f32 0.0, %v1853
  %v1855 = vpop.f32.mrf.mxu0
  %v1856 = vadd.f32 0.0, %v1855
  %v1857 = vpop.f32.mrf.mxu0
  %v1858 = vpop.f32.mrf.mxu0
  %1859 = vdwg.mxu0
  %v1860 = vmax.f32 %v1772, 0.0
  %v1861 = vmax.f32 %v1774, 0.0
  %v1862 = vmax.f32 %v1813, 0.0
  %v1863 = vmax.f32 %v1815, 0.0
  %v1864 = vmax.f32 %v1854, 0.0
  %v1865 = vmax.f32 %v1856, 0.0
  %v1867 = vlaneseq
  %v1868 = vshrl.u32 %v1867, 7
  %v1869 = vsub.s32 0, %v1868
  %v1870 = vrot.slane %v1448, %v1869
  %v1871 = vlaneseq
  %v1872 = vshrl.u32 %v1871, 7
  %v1873 = vsub.s32 1, %v1872
  %v1874 = vrot.slane %v1448, %v1873
  %v1875 = vlaneseq
  %v1876 = vshrl.u32 %v1875, 7
  %v1877 = vsub.s32 2, %v1876
  %v1878 = vrot.slane %v1448, %v1877
  %v1879 = vlaneseq
  %v1880 = vshrl.u32 %v1879, 7
  %v1881 = vsub.s32 3, %v1880
  %v1882 = vrot.slane %v1448, %v1881
  %v1883 = vlaneseq
  %v1884 = vshrl.u32 %v1883, 7
  %v1885 = vsub.s32 4, %v1884
  %v1886 = vrot.slane %v1448, %v1885
  %v1887 = vlaneseq
  %v1888 = vshrl.u32 %v1887, 7
  %v1889 = vsub.s32 5, %v1888
  %v1890 = vrot.slane %v1448, %v1889
  %v1897 = vmul.f32 %v1860, %v1870
  %v1898 = vmul.f32 %v1861, %v1874
  %v1899 = vmul.f32 %v1862, %v1878
  %v1900 = vmul.f32 %v1863, %v1882
  %v1901 = vmul.f32 %v1864, %v1886
  %v1902 = vmul.f32 %v1865, %v1890
  %v1903 = vpack.c.bf16 %v1897, %v1897
  %v1904 = vpack.c.bf16 %v1898, %v1898
  %v1905 = vpack.c.bf16 %v1899, %v1899
  %v1906 = vpack.c.bf16 %v1900, %v1900
  %v1907 = vpack.c.bf16 %v1901, %v1901
  %v1908 = vpack.c.bf16 %v1902, %v1902
  %1914 = vrot.lane.b32.xlu0 %v1903, 19
  %v1915 = vpop.permute.xlu0 %1914
  %1916 = vrot.lane.b32.xlu0 %v1904, 19
  %v1917 = vpop.permute.xlu0 %1916
  %1918 = vrot.lane.b32.xlu0 %v1905, 19
  %v1919 = vpop.permute.xlu0 %1918
  %1920 = vrot.lane.b32.xlu0 %v1906, 19
  %v1921 = vpop.permute.xlu0 %1920
  %1922 = vrot.lane.b32.xlu0 %v1907, 19
  %v1923 = vpop.permute.xlu0 %1922
  %v1924 = vsel %vm367, %v1915, %v1917
  %v1925 = vsel %vm367, %v1917, %v1919
  %v1926 = vsel %vm367, %v1919, %v1921
  %v1927 = vsel %vm367, %v1921, %v1923
  %v1934 = vsel %vm372, 0, %v1915
  %1936 = vrot.lane.b32.xlu0 %v1903, 18
  %v1937 = vpop.permute.xlu0 %1936
  %1938 = vrot.lane.b32.xlu0 %v1904, 18
  %v1939 = vpop.permute.xlu0 %1938
  %1940 = vrot.lane.b32.xlu0 %v1905, 18
  %v1941 = vpop.permute.xlu0 %1940
  %1942 = vrot.lane.b32.xlu0 %v1906, 18
  %v1943 = vpop.permute.xlu0 %1942
  %1944 = vrot.lane.b32.xlu0 %v1907, 18
  %v1945 = vpop.permute.xlu0 %1944
  %v1946 = vsel %vm386, %v1937, %v1939
  %v1947 = vsel %vm386, %v1939, %v1941
  %v1948 = vsel %vm386, %v1941, %v1943
  %v1949 = vsel %vm386, %v1943, %v1945
  %v1951 = vsel %vm391, 0, %v1937
  %1952 = vrot.lane.b32.xlu0 %v1903, 17
  %v1953 = vpop.permute.xlu0 %1952
  %1954 = vrot.lane.b32.xlu0 %v1904, 17
  %v1955 = vpop.permute.xlu0 %1954
  %1956 = vrot.lane.b32.xlu0 %v1905, 17
  %v1957 = vpop.permute.xlu0 %1956
  %1958 = vrot.lane.b32.xlu0 %v1906, 17
  %v1959 = vpop.permute.xlu0 %1958
  %1960 = vrot.lane.b32.xlu0 %v1907, 17
  %v1961 = vpop.permute.xlu0 %1960
  %v1962 = vsel %vm404, %v1953, %v1955
  %v1963 = vsel %vm404, %v1955, %v1957
  %v1964 = vsel %vm404, %v1957, %v1959
  %v1965 = vsel %vm404, %v1959, %v1961
  %v1967 = vsel %vm409, 0, %v1953
  %1969 = vrot.lane.b32.xlu0 %v1903, 1
  %v1970 = vpop.permute.xlu0 %1969
  %1971 = vrot.lane.b32.xlu0 %v1904, 1
  %v1972 = vpop.permute.xlu0 %1971
  %1973 = vrot.lane.b32.xlu0 %v1905, 1
  %v1974 = vpop.permute.xlu0 %1973
  %1975 = vrot.lane.b32.xlu0 %v1906, 1
  %v1976 = vpop.permute.xlu0 %1975
  %1977 = vrot.lane.b32.xlu0 %v1907, 1
  %v1978 = vpop.permute.xlu0 %1977
  %1979 = vrot.lane.b32.xlu0 %v1908, 1
  %v1980 = vpop.permute.xlu0 %1979
  %v1981 = vsel %vm425, %v1970, %v1972
  %v1982 = vsel %vm425, %v1972, %v1974
  %v1983 = vsel %vm425, %v1974, %v1976
  %v1984 = vsel %vm425, %v1976, %v1978
  %v1985 = vsel %vm425, %v1978, %v1980
  %v1987 = vsel %vm431, 0, %v1970
  %1988 = vrot.lane.b32.xlu0 %v1903, 127
  %v1989 = vpop.permute.xlu0 %1988
  %1990 = vrot.lane.b32.xlu0 %v1904, 127
  %v1991 = vpop.permute.xlu0 %1990
  %1992 = vrot.lane.b32.xlu0 %v1905, 127
  %v1993 = vpop.permute.xlu0 %1992
  %1994 = vrot.lane.b32.xlu0 %v1906, 127
  %v1995 = vpop.permute.xlu0 %1994
  %1996 = vrot.lane.b32.xlu0 %v1907, 127
  %v1997 = vpop.permute.xlu0 %1996
  %1998 = vrot.lane.b32.xlu0 %v1908, 127
  %v1999 = vpop.permute.xlu0 %1998
  %v2000 = vsel %vm446, %v1989, %v1991
  %v2001 = vsel %vm446, %v1991, %v1993
  %v2002 = vsel %vm446, %v1993, %v1995
  %v2003 = vsel %vm446, %v1995, %v1997
  %v2004 = vsel %vm446, %v1997, %v1999
  %v2006 = vsel %vm452, %v1999, 0
  %2007 = vrot.lane.b32.xlu0 %v1903, 111
  %v2008 = vpop.permute.xlu0 %2007
  %2009 = vrot.lane.b32.xlu0 %v1904, 111
  %v2010 = vpop.permute.xlu0 %2009
  %2011 = vrot.lane.b32.xlu0 %v1905, 111
  %v2012 = vpop.permute.xlu0 %2011
  %2013 = vrot.lane.b32.xlu0 %v1906, 111
  %v2014 = vpop.permute.xlu0 %2013
  %2015 = vrot.lane.b32.xlu0 %v1907, 111
  %v2016 = vpop.permute.xlu0 %2015
  %2017 = vrot.lane.b32.xlu0 %v1908, 111
  %v2018 = vpop.permute.xlu0 %2017
  %v2019 = vsel %vm467, %v2008, %v2010
  %v2020 = vsel %vm467, %v2010, %v2012
  %v2021 = vsel %vm467, %v2012, %v2014
  %v2022 = vsel %vm467, %v2014, %v2016
  %v2023 = vsel %vm467, %v2016, %v2018
  %v2025 = vsel %vm473, %v2023, 0
  %2026 = vrot.lane.b32.xlu0 %v1903, 110
  %v2027 = vpop.permute.xlu0 %2026
  %2028 = vrot.lane.b32.xlu0 %v1904, 110
  %v2029 = vpop.permute.xlu0 %2028
  %2030 = vrot.lane.b32.xlu0 %v1905, 110
  %v2031 = vpop.permute.xlu0 %2030
  %2032 = vrot.lane.b32.xlu0 %v1906, 110
  %v2033 = vpop.permute.xlu0 %2032
  %2034 = vrot.lane.b32.xlu0 %v1907, 110
  %v2035 = vpop.permute.xlu0 %2034
  %2036 = vrot.lane.b32.xlu0 %v1908, 110
  %v2037 = vpop.permute.xlu0 %2036
  %v2038 = vsel %vm488, %v2027, %v2029
  %v2039 = vsel %vm488, %v2029, %v2031
  %v2040 = vsel %vm488, %v2031, %v2033
  %v2041 = vsel %vm488, %v2033, %v2035
  %v2042 = vsel %vm488, %v2035, %v2037
  %v2044 = vsel %vm494, %v2042, 0
  %2045 = vrot.lane.b32.xlu0 %v1903, 109
  %v2046 = vpop.permute.xlu0 %2045
  %2047 = vrot.lane.b32.xlu0 %v1904, 109
  %v2048 = vpop.permute.xlu0 %2047
  %2049 = vrot.lane.b32.xlu0 %v1905, 109
  %v2050 = vpop.permute.xlu0 %2049
  %2051 = vrot.lane.b32.xlu0 %v1906, 109
  %v2052 = vpop.permute.xlu0 %2051
  %2053 = vrot.lane.b32.xlu0 %v1907, 109
  %v2054 = vpop.permute.xlu0 %2053
  %2055 = vrot.lane.b32.xlu0 %v1908, 109
  %v2056 = vpop.permute.xlu0 %2055
  %v2057 = vsel %vm509, %v2046, %v2048
  %v2058 = vsel %vm509, %v2048, %v2050
  %v2059 = vsel %vm509, %v2050, %v2052
  %v2060 = vsel %vm509, %v2052, %v2054
  %v2061 = vsel %vm509, %v2054, %v2056
  %v2063 = vsel %vm515, %v2061, 0
  %v2064 = vshll.u32 %v1951, 16
  %v2067 = vshll.u32 %v1946, 16
  %v2070 = vshll.u32 %v1947, 16
  %v2073 = vshll.u32 %v1948, 16
  %v2076 = vshll.u32 %v1949, 16
  %v2079 = vshll.u32 %v1945, 16
  %v2088 = vrot.slane %v1967, 7
  %v2089 = vrot.slane %v1962, 7
  %v2090 = vrot.slane %v1963, 7
  %v2091 = vrot.slane %v1964, 7
  %v2092 = vrot.slane %v1965, 7
  %v2093 = vrot.slane %v1961, 7
  %v2094 = vshll.u32 %v1987, 16
  %v2096 = vrot.slane %v2094, 7
  %v2098 = vshll.u32 %v1981, 16
  %v2100 = vrot.slane %v2098, 7
  %v2102 = vshll.u32 %v1982, 16
  %v2104 = vrot.slane %v2102, 7
  %v2106 = vshll.u32 %v1983, 16
  %v2108 = vrot.slane %v2106, 7
  %v2110 = vshll.u32 %v1984, 16
  %v2112 = vrot.slane %v2110, 7
  %v2114 = vshll.u32 %v1985, 16
  %v2116 = vrot.slane %v2114, 7
  %v2123 = vrot.slane %v1903, 6
  %v2124 = vrot.slane %v1904, 6
  %v2125 = vrot.slane %v1905, 6
  %v2126 = vrot.slane %v1906, 6
  %v2127 = vrot.slane %v1907, 6
  %v2128 = vrot.slane %v1908, 6
  %v2130 = vshll.u32 %v2000, 16
  %v2132 = vrot.slane %v2130, 6
  %v2134 = vshll.u32 %v2001, 16
  %v2136 = vrot.slane %v2134, 6
  %v2138 = vshll.u32 %v2002, 16
  %v2140 = vrot.slane %v2138, 6
  %v2142 = vshll.u32 %v2003, 16
  %v2144 = vrot.slane %v2142, 6
  %v2146 = vshll.u32 %v2004, 16
  %v2148 = vrot.slane %v2146, 6
  %v2149 = vshll.u32 %v2006, 16
  %v2151 = vrot.slane %v2149, 6
  %v2159 = vrot.slane %v2019, 5
  %v2160 = vrot.slane %v2020, 5
  %v2161 = vrot.slane %v2021, 5
  %v2162 = vrot.slane %v2022, 5
  %v2163 = vrot.slane %v2025, 5
  %v2165 = vshll.u32 %v2038, 16
  %v2167 = vrot.slane %v2165, 5
  %v2169 = vshll.u32 %v2039, 16
  %v2171 = vrot.slane %v2169, 5
  %v2173 = vshll.u32 %v2040, 16
  %v2175 = vrot.slane %v2173, 5
  %v2177 = vshll.u32 %v2041, 16
  %v2179 = vrot.slane %v2177, 5
  %v2180 = vshll.u32 %v2044, 16
  %v2182 = vrot.slane %v2180, 5
  %v2189 = vrot.slane %v2057, 4
  %v2190 = vrot.slane %v2058, 4
  %v2191 = vrot.slane %v2059, 4
  %v2192 = vrot.slane %v2060, 4
  %v2193 = vrot.slane %v2063, 4
  %v2194 = vsel %vm1124, %v1934, %v2064
  %v2195 = vsel %vm1124, %v1924, %v2067
  %v2196 = vsel %vm1124, %v1925, %v2070
  %v2197 = vsel %vm1124, %v1926, %v2073
  %v2198 = vsel %vm1124, %v1927, %v2076
  %v2199 = vsel %vm1124, %v1923, %v2079
  %v2202 = vsel %vm1131, %v2194, %v2088
  %v2206 = vsel %vm1131, %v2195, %v2089
  %v2210 = vsel %vm1131, %v2196, %v2090
  %v2214 = vsel %vm1131, %v2197, %v2091
  %v2218 = vsel %vm1131, %v2198, %v2092
  %v2222 = vsel %vm1131, %v2199, %v2093
  %v2224 = vsel %vm1158, %v2202, %v2096
  %v2225 = vsel %vm1158, %v2206, %v2100
  %v2226 = vsel %vm1158, %v2210, %v2104
  %v2227 = vsel %vm1158, %v2214, %v2108
  %v2228 = vsel %vm1158, %v2218, %v2112
  %v2229 = vsel %vm1158, %v2222, %v2116
  %v2232 = vsel %vm1165, %v2224, %v2123
  %v2236 = vsel %vm1165, %v2225, %v2124
  %v2240 = vsel %vm1165, %v2226, %v2125
  %v2244 = vsel %vm1165, %v2227, %v2126
  %v2248 = vsel %vm1165, %v2228, %v2127
  %v2252 = vsel %vm1165, %v2229, %v2128
  %v2254 = vsel %vm1192, %v2232, %v2132
  %v2255 = vsel %vm1192, %v2236, %v2136
  %v2256 = vsel %vm1192, %v2240, %v2140
  %v2257 = vsel %vm1192, %v2244, %v2144
  %v2258 = vsel %vm1192, %v2248, %v2148
  %v2259 = vsel %vm1192, %v2252, %v2151
  %v2262 = vsel %vm1199, %v2254, %v2159
  %v2266 = vsel %vm1199, %v2255, %v2160
  %v2270 = vsel %vm1199, %v2256, %v2161
  %v2274 = vsel %vm1199, %v2257, %v2162
  %v2278 = vsel %vm1199, %v2258, %v2163
  %v2281 = vsel %vm1199, %v2259, %v1087
  %v2283 = vsel %vm1226, %v2262, %v2167
  %v2284 = vsel %vm1226, %v2266, %v2171
  %v2285 = vsel %vm1226, %v2270, %v2175
  %v2286 = vsel %vm1226, %v2274, %v2179
  %v2287 = vsel %vm1226, %v2278, %v2182
  %v2288 = vsel %vm1226, %v2281, %v1109
  %v2291 = vsel %vm547, %v2283, %v2189
  %v2294 = vsel %vm547, %v2284, %v2190
  %v2297 = vsel %vm547, %v2285, %v2191
  %v2300 = vsel %vm547, %v2286, %v2192
  %v2303 = vsel %vm547, %v2287, %v2193
  %v2305 = vsel %vm547, %v2288, %v546
  %v2307 = vsel %vm1250, %v1447, 0
  %v2309 = vand.u32 %v2291, %v1256
  %v2311 = vand.u32 %v2294, %v1256
  %v2313 = vand.u32 %v2297, %v1256
  %v2315 = vand.u32 %v2300, %v1256
  %v2317 = vand.u32 %v2303, %v1256
  %v2319 = vand.u32 %v2305, %v1256
  %2321 = vmatprep.subr.bf16.mxu0 0
  %2322 = vmatpush1.bf16.msra.mxu0 0
  %2323 = vmatprep.subr.bf16.mxu0 0
  %2324 = vmatpush1.bf16.msra.mxu0 0
  %2325 = vmatprep.subr.bf16.mxu0 0
  %2326 = vmatpush1.bf16.msra.mxu0 0
  %2327 = vmatprep.subr.bf16.mxu0 0
  %2328 = vmatpush1.bf16.msra.mxu0 0
  %2329 = vmatprep.subr.bf16.mxu0 0
  %2330 = vmatpush1.bf16.msra.mxu0 0
  %2331 = vmatprep.subr.bf16.mxu0 0
  %2332 = vmatpush1.bf16.msra.mxu0 0
  %2333 = vmatprep.subr.bf16.mxu0 0
  %2334 = vmatpush1.bf16.msra.mxu0 0
  %2335 = vmatprep.subr.bf16.mxu0 %v2311
  %2336 = vmatpush1.bf16.msra.mxu0 %v2309
  %2337 = vmatprep.subr.bf16.mxu0 0
  %2338 = vmatpush2.bf16.msra.mxu0 0
  %2339 = vmatprep.subr.bf16.mxu0 0
  %2340 = vmatpush2.bf16.msra.mxu0 0
  %2341 = vmatprep.subr.bf16.mxu0 0
  %2342 = vmatpush2.bf16.msra.mxu0 0
  %2343 = vmatprep.subr.bf16.mxu0 0
  %2344 = vmatpush2.bf16.msra.mxu0 0
  %2345 = vmatprep.subr.bf16.mxu0 0
  %2346 = vmatpush2.bf16.msra.mxu0 0
  %2347 = vmatprep.subr.bf16.mxu0 0
  %2348 = vmatpush2.bf16.msra.mxu0 0
  %2349 = vmatprep.subr.bf16.mxu0 0
  %2350 = vmatpush2.bf16.msra.mxu0 0
  %2351 = vmatprep.subr.bf16.mxu0 0
  %2352 = vmatpush2.bf16.msra.mxu0 0
  %2353 = vmatprep.mubr.bf16.mxu0 0
  %2354 = vmatmul.mubr.bf16.gmra.mxu0 %v2307
  %v2355 = vpop.f32.mrf.mxu0
  %v2356 = vadd.f32 0.0, %v2355
  %v2357 = vpop.f32.mrf.mxu0
  %v2358 = vadd.f32 0.0, %v2357
  %v2359 = vpop.f32.mrf.mxu0
  %v2360 = vpop.f32.mrf.mxu0
  %2361 = vdwg.mxu0
  %2362 = vmatprep.subr.bf16.mxu0 0
  %2363 = vmatpush1.bf16.msra.mxu0 0
  %2364 = vmatprep.subr.bf16.mxu0 0
  %2365 = vmatpush1.bf16.msra.mxu0 0
  %2366 = vmatprep.subr.bf16.mxu0 0
  %2367 = vmatpush1.bf16.msra.mxu0 0
  %2368 = vmatprep.subr.bf16.mxu0 0
  %2369 = vmatpush1.bf16.msra.mxu0 0
  %2370 = vmatprep.subr.bf16.mxu0 0
  %2371 = vmatpush1.bf16.msra.mxu0 0
  %2372 = vmatprep.subr.bf16.mxu0 0
  %2373 = vmatpush1.bf16.msra.mxu0 0
  %2374 = vmatprep.subr.bf16.mxu0 0
  %2375 = vmatpush1.bf16.msra.mxu0 0
  %2376 = vmatprep.subr.bf16.mxu0 %v2315
  %2377 = vmatpush1.bf16.msra.mxu0 %v2313
  %2378 = vmatprep.subr.bf16.mxu0 0
  %2379 = vmatpush2.bf16.msra.mxu0 0
  %2380 = vmatprep.subr.bf16.mxu0 0
  %2381 = vmatpush2.bf16.msra.mxu0 0
  %2382 = vmatprep.subr.bf16.mxu0 0
  %2383 = vmatpush2.bf16.msra.mxu0 0
  %2384 = vmatprep.subr.bf16.mxu0 0
  %2385 = vmatpush2.bf16.msra.mxu0 0
  %2386 = vmatprep.subr.bf16.mxu0 0
  %2387 = vmatpush2.bf16.msra.mxu0 0
  %2388 = vmatprep.subr.bf16.mxu0 0
  %2389 = vmatpush2.bf16.msra.mxu0 0
  %2390 = vmatprep.subr.bf16.mxu0 0
  %2391 = vmatpush2.bf16.msra.mxu0 0
  %2392 = vmatprep.subr.bf16.mxu0 0
  %2393 = vmatpush2.bf16.msra.mxu0 0
  %2394 = vmatprep.mubr.bf16.mxu0 0
  %2395 = vmatmul.mubr.bf16.gmra.mxu0 %v2307
  %v2396 = vpop.f32.mrf.mxu0
  %v2397 = vadd.f32 0.0, %v2396
  %v2398 = vpop.f32.mrf.mxu0
  %v2399 = vadd.f32 0.0, %v2398
  %v2400 = vpop.f32.mrf.mxu0
  %v2401 = vpop.f32.mrf.mxu0
  %2402 = vdwg.mxu0
  %2403 = vmatprep.subr.bf16.mxu0 0
  %2404 = vmatpush1.bf16.msra.mxu0 0
  %2405 = vmatprep.subr.bf16.mxu0 0
  %2406 = vmatpush1.bf16.msra.mxu0 0
  %2407 = vmatprep.subr.bf16.mxu0 0
  %2408 = vmatpush1.bf16.msra.mxu0 0
  %2409 = vmatprep.subr.bf16.mxu0 0
  %2410 = vmatpush1.bf16.msra.mxu0 0
  %2411 = vmatprep.subr.bf16.mxu0 0
  %2412 = vmatpush1.bf16.msra.mxu0 0
  %2413 = vmatprep.subr.bf16.mxu0 0
  %2414 = vmatpush1.bf16.msra.mxu0 0
  %2415 = vmatprep.subr.bf16.mxu0 0
  %2416 = vmatpush1.bf16.msra.mxu0 0
  %2417 = vmatprep.subr.bf16.mxu0 %v2319
  %2418 = vmatpush1.bf16.msra.mxu0 %v2317
  %2419 = vmatprep.subr.bf16.mxu0 0
  %2420 = vmatpush2.bf16.msra.mxu0 0
  %2421 = vmatprep.subr.bf16.mxu0 0
  %2422 = vmatpush2.bf16.msra.mxu0 0
  %2423 = vmatprep.subr.bf16.mxu0 0
  %2424 = vmatpush2.bf16.msra.mxu0 0
  %2425 = vmatprep.subr.bf16.mxu0 0
  %2426 = vmatpush2.bf16.msra.mxu0 0
  %2427 = vmatprep.subr.bf16.mxu0 0
  %2428 = vmatpush2.bf16.msra.mxu0 0
  %2429 = vmatprep.subr.bf16.mxu0 0
  %2430 = vmatpush2.bf16.msra.mxu0 0
  %2431 = vmatprep.subr.bf16.mxu0 0
  %2432 = vmatpush2.bf16.msra.mxu0 0
  %2433 = vmatprep.subr.bf16.mxu0 0
  %2434 = vmatpush2.bf16.msra.mxu0 0
  %2435 = vmatprep.mubr.bf16.mxu0 0
  %2436 = vmatmul.mubr.bf16.gmra.mxu0 %v2307
  %v2437 = vpop.f32.mrf.mxu0
  %v2438 = vadd.f32 0.0, %v2437
  %v2439 = vpop.f32.mrf.mxu0
  %v2440 = vadd.f32 0.0, %v2439
  %v2441 = vpop.f32.mrf.mxu0
  %v2442 = vpop.f32.mrf.mxu0
  %2443 = vdwg.mxu0
  %v2444 = vmax.f32 %v2356, 0.0
  %v2445 = vmax.f32 %v2358, 0.0
  %v2446 = vmax.f32 %v2397, 0.0
  %v2447 = vmax.f32 %v2399, 0.0
  %v2448 = vmax.f32 %v2438, 0.0
  %v2449 = vmax.f32 %v2440, 0.0
  %v2450 = vmul.f32 %v2444, %v1870
  %v2451 = vmul.f32 %v2445, %v1874
  %v2452 = vmul.f32 %v2446, %v1878
  %v2453 = vmul.f32 %v2447, %v1882
  %v2454 = vmul.f32 %v2448, %v1886
  %v2455 = vmul.f32 %v2449, %v1890
  %v2456 = vsel %vm1131, %v2450, %v1897
  %v2457 = vsel %vm1131, %v2451, %v1898
  %v2458 = vsel %vm1131, %v2452, %v1899
  %v2459 = vsel %vm1131, %v2453, %v1900
  %v2460 = vsel %vm1131, %v2454, %v1901
  %v2461 = vsel %vm1131, %v2455, %v1902
  %v2468 = vcombine.low %v2456, %v2457
  %v2469 = vcombine.low %v2458, %v2459
  %v2470 = vcombine.low %v2460, %v2461
  %2474 = vst [vmem:[%s9] sm:$0xff] %v2468
  %2475 = vst [vmem:[%s9 + $0x8] sm:$0xff] %v2469
  %vm2476 = vcmask 64516
  %vm2477 = vmor %vm2476, %vm547
  %2478 = vst.msk [vmem:[%s9 + $0x10] sm:$0xff] %vm2477, %v2470
  // Predicated region
  $region38: #{up_forward.1} parent=0 // pred_check
    _
  $region39: #{up_forward.1} parent=0 // pred_check_branch
    %2480 = sbr.rel (0) target = $region41
  $region40: #{up_forward.1} parent=0 // pred_region
    _
  $region41: #{up_forward.1} parent=0 // pred_fallthru
    _
  // Predicated region
  $region42: #{up_forward.1} parent=0 // pred_check
    _
  $region43: #{up_forward.1} parent=0 // pred_check_branch
    %2482 = sbr.rel (0) target = $region45
  $region44: #{up_forward.1} parent=0 // pred_region
    _
  $region45: #{up_forward.1} parent=0 // pred_fallthru
    _

</llo_original>
